<compile_context>
chip_gen: v6e
topology: v6e:2x2x1
jax: 0.10.0
libtpu: 0.0.40
codegen_flags: <defaults>
</compile_context>

<pallas_src>
import functools
import math

import jax
import jax.numpy as jnp
from jax.experimental import pallas as pl
from jax.experimental.pallas import tpu as pltpu

NEG_INF = -1e30  # large finite negative (avoids -inf arithmetic hazards)


def _qkv_kernel(x_ref, w_ref, q_ref, k_ref, v_ref, *, num_heads, head_dim, d_out):
    """x block (1, tm, d_in) bf16; w (d_in, 3*d_out) bf16 (grid-invariant).

    Single MXU matmul for Q|K|V, result split per head and stored in
    (B, H, T, hd) layout (head split done once here, VMEM-resident, instead of
    a full HBM read+write transpose between the two kernels).
    """
    qkv = jnp.dot(x_ref[0], w_ref[...], preferred_element_type=jnp.float32)  # (tm, 3*d_out)
    for h in range(num_heads):                       # small static loop; lane slices
        lo = h * head_dim
        hi = lo + head_dim
        q_ref[0, h] = qkv[:, lo:hi].astype(q_ref.dtype)                      # scale pre-folded
        k_ref[0, h] = qkv[:, d_out + lo:d_out + hi].astype(k_ref.dtype)
        v_ref[0, h] = qkv[:, 2 * d_out + lo:2 * d_out + hi].astype(v_ref.dtype)


def _flash_kernel(q_ref, k_ref, v_ref, wo_ref, bo_ref, o_ref,
                  m_sc, l_sc, acc_sc, *, tq, tk, num_heads, d_out):
    qi = pl.program_id(1)
    ki = pl.program_id(2)

    @pl.when(ki == 0)
    def _init():
        m_sc[...] = jnp.full_like(m_sc, NEG_INF)
        l_sc[...] = jnp.zeros_like(l_sc)
        acc_sc[...] = jnp.zeros_like(acc_sc)

    def _scores():
        # All heads in one batched MXU contraction over hd (no explicit k.T).
        return jax.lax.dot_general(q_ref[0], k_ref[0], (((2,), (2,)), ((0,), (0,))),
                                   preferred_element_type=jnp.float32)       # (H, tq, tk)

    def _online_update(s):
        m_prev = m_sc[...]
        m_new = jnp.maximum(m_prev, jnp.max(s, axis=-1, keepdims=True))
        alpha = jnp.exp(m_prev - m_new)
        p = jnp.exp(s - m_new)                                               # (H, tq, tk)
        l_sc[...] = alpha * l_sc[...] + jnp.sum(p, axis=-1, keepdims=True)
        pv = jax.lax.dot_general(p.astype(v_ref.dtype), v_ref[0],
                                 (((2,), (1,)), ((0,), (0,))),
                                 preferred_element_type=jnp.float32)         # (H, tq, hd)
        acc_sc[...] = alpha * acc_sc[...] + pv
        m_sc[...] = m_new

    # Block classification (static tile sizes, scalar grid indices):
    #   below    : every col <= every row  -> no mask needed
    #   straddle : some valid cols AND some future cols -> apply causal mask
    #   (neither): block fully in the future -> skipped (and its K/V DMA is
    #              elided by the clamped index_map in the wrapper)
    below = ki * tk + tk - 1 <= qi * tq
    straddle = jnp.logical_and(ki * tk <= qi * tq + tq - 1,
                               ki * tk + tk - 1 > qi * tq)

    @pl.when(below)
    def _accumulate_unmasked():
        _online_update(_scores())

    @pl.when(straddle)
    def _accumulate_masked():
        s = _scores()
        row = qi * tq + jax.lax.broadcasted_iota(jnp.int32, (tq, tk), 0)
        col = ki * tk + jax.lax.broadcasted_iota(jnp.int32, (tq, tk), 1)
        s = jnp.where((col > row)[None, :, :], NEG_INF, s)
        _online_update(s)

    # Finalize at the global last kv step (scratch persists across ki, so this
    # is correct even when that step's compute was skipped for early qi).
    @pl.when(ki == pl.num_programs(2) - 1)
    def _finalize():
        inv_l = pl.reciprocal(l_sc[...], approx=True)   # EUP slot; VALU stays free
        ctx = acc_sc[...] * inv_l                       # (H, tq, hd) f32
        # Output projection fused here.  Contract over (head, hd) as K-chunked
        # matmuls against W_out reshaped (H, hd, d_out); a static per-head loop
        # avoids an in-kernel head transpose / lane-dim relayout (epilogue-only).
        acc_out = jnp.zeros((tq, d_out), jnp.float32)
        for h in range(num_heads):
            acc_out = acc_out + jnp.dot(ctx[h].astype(wo_ref.dtype), wo_ref[h],
                                        preferred_element_type=jnp.float32)
        o_ref[0] = (acc_out + bo_ref[...]).astype(o_ref.dtype)


def par_multi_head_attention(x, w_query, w_key, w_value, w_out, b_out, *,
                             num_heads, block_q=128, block_k=128, block_m=512):
    """x: (B, T, d_in); w_q/k/v: (d_in, d_out); w_out: (d_out, d_out); b_out: (1, d_out)."""
    B, T, d_in = x.shape
    d_out = w_query.shape[1]
    assert d_out % num_heads == 0
    head_dim = d_out // num_heads
    scale = 1.0 / math.sqrt(head_dim)

    tm = min(block_m, T)
    tq = min(block_q, T)
    tk = min(block_k, T)
    assert T % tm == 0 and T % tq == 0 and T % tk == 0, "T must divide tile sizes"

    compute_dtype = jnp.bfloat16        # MXU-friendly operands; f32 accumulation
    x_bf16 = x.astype(compute_dtype)    # halves kernel-1 input DMA bytes
    # Fused QKV weight: one (d_in, 3*d_out) matmul; softmax scale folded into
    # the Q columns (weight-sized op, negligible vs the activation matmuls).
    w_qkv = jnp.concatenate([w_query * scale, w_key, w_value], axis=1).astype(compute_dtype)
    # Row-split W_out by head: out = sum_h ctx_h @ W_out[h*hd:(h+1)*hd, :]
    wo = w_out.reshape(num_heads, head_dim, d_out).astype(compute_dtype)
    bo = b_out.astype(jnp.float32)

    # Explicit scoped-VMEM budget: above v5e's 16 MiB scoped default, below
    # v7x's 64 MiB physical per-TC capacity, comfortable on v6e (128 MiB).
    vmem_limit = 48 * 1024 * 1024

    # ---------------- Kernel 1: fused QKV projection (head-split output) ----------------
    q, k, v = pl.pallas_call(
        functools.partial(_qkv_kernel, num_heads=num_heads,
                          head_dim=head_dim, d_out=d_out),
        out_shape=tuple(jax.ShapeDtypeStruct((B, num_heads, T, head_dim), compute_dtype)
                        for _ in range(3)),
        grid_spec=pltpu.PrefetchScalarGridSpec(
            num_scalar_prefetch=0,
            grid=(B, T // tm),
            in_specs=[
                pl.BlockSpec((1, tm, d_in), lambda b, i: (b, i, 0)),
                pl.BlockSpec((d_in, 3 * d_out), lambda b, i: (0, 0)),   # grid-invariant
            ],
            out_specs=[
                pl.BlockSpec((1, num_heads, tm, head_dim), lambda b, i: (b, 0, i, 0)),
                pl.BlockSpec((1, num_heads, tm, head_dim), lambda b, i: (b, 0, i, 0)),
                pl.BlockSpec((1, num_heads, tm, head_dim), lambda b, i: (b, 0, i, 0)),
            ],
        ),
        compiler_params=pltpu.CompilerParams(
            dimension_semantics=("parallel", "parallel"),
            vmem_limit_bytes=vmem_limit),
    )(x_bf16, w_qkv)

    # ------- Kernel 2: flash attention + fused output projection -------
    def kv_index_map(b, i, j):
        # Clamp to the last causally-valid kv block for this query block, so
        # fully masked kv steps revisit the same block index and Pallas skips
        # the K/V DMA (~2x less K/V HBM traffic for causal attention).
        last_valid = (i * tq + tq - 1) // tk
        return (b, 0, jnp.minimum(j, last_valid), 0)

    out = pl.pallas_call(
        functools.partial(_flash_kernel, tq=tq, tk=tk,
                          num_heads=num_heads, d_out=d_out),
        out_shape=jax.ShapeDtypeStruct((B, T, d_out), x.dtype),
        grid_spec=pltpu.PrefetchScalarGridSpec(
            num_scalar_prefetch=0,
            grid=(B, T // tq, T // tk),
            in_specs=[
                pl.BlockSpec((1, num_heads, tq, head_dim), lambda b, i, j: (b, 0, i, 0)),
                pl.BlockSpec((1, num_heads, tk, head_dim), kv_index_map),
                pl.BlockSpec((1, num_heads, tk, head_dim), kv_index_map),
                pl.BlockSpec((num_heads, head_dim, d_out), lambda b, i, j: (0, 0, 0)),
                pl.BlockSpec((1, d_out), lambda b, i, j: (0, 0)),
            ],
            out_specs=pl.BlockSpec((1, tq, d_out), lambda b, i, j: (b, i, 0)),
            scratch_shapes=[
                pltpu.VMEM((num_heads, tq, 1), jnp.float32),        # running max
                pltpu.VMEM((num_heads, tq, 1), jnp.float32),        # running sum
                pltpu.VMEM((num_heads, tq, head_dim), jnp.float32), # context acc
            ],
        ),
        compiler_params=pltpu.CompilerParams(
            dimension_semantics=("parallel", "parallel", "arbitrary"),
            vmem_limit_bytes=vmem_limit),
    )(q, k, v, wo, bo)
    return out


def _reference(x, w_query, w_key, w_value, w_out, b_out, *, num_heads):
    """Pure-JAX f32 reference mirroring the PyTorch forward (eval mode)."""
    B, T, _ = x.shape
    d_out = w_query.shape[1]
    hd = d_out // num_heads

    def split(z):  # (B, T, d_out) -> (B, H, T, hd)
        return z.reshape(B, T, num_heads, hd).transpose(0, 2, 1, 3)

    q = split(x @ w_query)
    k = split(x @ w_key)
    v = split(x @ w_value)

    scores = jnp.einsum("bhqd,bhkd->bhqk", q, k)
    mask = jnp.triu(jnp.ones((T, T), dtype=bool), k=1)
    scores = jnp.where(mask[None, None], -jnp.inf, scores)
    weights = jax.nn.softmax(scores / math.sqrt(hd), axis=-1)
    ctx = jnp.einsum("bhqk,bhkd->bhqd", weights, v)
    ctx = ctx.transpose(0, 2, 1, 3).reshape(B, T, d_out)
    return ctx @ w_out + b_out


if __name__ == "__main__":
    # Small, TPU-lane-aligned shapes (d_out multiple of 128; T exercises the
    # multi-block online softmax, the causal DMA clamp, and the mask-free path).
    batch, seq, d_in, d_out, num_heads = 2, 256, 64, 128, 2

    key = jax.random.PRNGKey(0)
    kx, kq, kk, kv, ko, kb = jax.random.split(key, 6)

    x = jax.random.normal(kx, (batch, seq, d_in), dtype=jnp.float32)

    # nn.Linear weights are (d_out, d_in); stored pre-transposed (d_in, d_out).
    scale_in = 1.0 / math.sqrt(d_in)
    scale_out = 1.0 / math.sqrt(d_out)
    w_query = jax.random.uniform(kq, (d_in, d_out), jnp.float32, -scale_in, scale_in)
    w_key = jax.random.uniform(kk, (d_in, d_out), jnp.float32, -scale_in, scale_in)
    w_value = jax.random.uniform(kv, (d_in, d_out), jnp.float32, -scale_in, scale_in)
    w_out = jax.random.uniform(ko, (d_out, d_out), jnp.float32, -scale_out, scale_out)
    b_out = jax.random.uniform(kb, (1, d_out), jnp.float32, -scale_out, scale_out)

    out = par_multi_head_attention(x, w_query, w_key, w_value, w_out, b_out,
                                   num_heads=num_heads)
    out = jax.block_until_ready(out)

    ref = _reference(x, w_query, w_key, w_value, w_out, b_out, num_heads=num_heads)
    assert out.shape == (batch, seq, d_out)
    # bf16 matmul operands (f32 accumulation) vs f32 reference -> relaxed tolerance.
    assert jnp.allclose(out, ref, atol=2e-2, rtol=2e-2), "mismatch vs reference"

    print("KERNEL_OK")
</pallas_src>

<mosaic_0001>
module attributes {stable_mosaic.version = 11 : i64} {
  func.func @_qkv_kernel(%arg0: i32, %arg1: i32, %arg2: memref<1x256x64xbf16, #tpu.memory_space<vmem>>, %arg3: memref<64x384xbf16, #tpu.memory_space<vmem>>, %arg4: memref<1x2x256x64xbf16, #tpu.memory_space<vmem>>, %arg5: memref<1x2x256x64xbf16, #tpu.memory_space<vmem>>, %arg6: memref<1x2x256x64xbf16, #tpu.memory_space<vmem>>) attributes {dimension_semantics = [#tpu.dimension_semantics<parallel>, #tpu.dimension_semantics<parallel>], iteration_bounds = array<i64: 2, 1>, scalar_prefetch = 0 : i64, scratch_operands = 0 : i64, tpu.core_type = #tpu.core_type<tc>, window_params = [{transform_indices = @transform_0, window_bounds = array<i64: 1, 256, 64>}, {pipeline_mode = #tpu.pipeline_mode<synchronous>, transform_indices = @transform_1, window_bounds = array<i64: 64, 384>}, {transform_indices = @transform_2, window_bounds = array<i64: 1, 2, 256, 64>}, {transform_indices = @transform_3, window_bounds = array<i64: 1, 2, 256, 64>}, {transform_indices = @transform_4, window_bounds = array<i64: 1, 2, 256, 64>}]} {
    %c0 = arith.constant 0 : index
    %c0_0 = arith.constant 0 : index
    %c0_1 = arith.constant 0 : index
    %0 = vector.load %arg2[%c0, %c0_0, %c0_1] : memref<1x256x64xbf16, #tpu.memory_space<vmem>>, vector<1x256x64xbf16>
    %1 = vector.shape_cast %0 : vector<1x256x64xbf16> to vector<256x64xbf16>
    %c0_2 = arith.constant 0 : index
    %c0_3 = arith.constant 0 : index
    %2 = vector.load %arg3[%c0_2, %c0_3] : memref<64x384xbf16, #tpu.memory_space<vmem>>, vector<64x384xbf16>
    %cst = arith.constant dense<0.000000e+00> : vector<256x384xf32>
    %3 = tpu.matmul %1, %2, %cst {dimension_numbers = #tpu.dot_dimension_numbers<[1], [0], [0], [1], [0, 0, 1, 1], [], []>} : vector<256x64xbf16>, vector<64x384xbf16>, vector<256x384xf32> -> vector<256x384xf32>
    %4 = vector.extract_strided_slice %3 {offsets = [0, 0], sizes = [256, 64], strides = [1, 1]} : vector<256x384xf32> to vector<256x64xf32>
    %5 = arith.truncf %4 : vector<256x64xf32> to vector<256x64xbf16>
    %c0_4 = arith.constant 0 : index
    %c0_5 = arith.constant 0 : index
    %c0_6 = arith.constant 0 : index
    %c0_7 = arith.constant 0 : index
    %6 = vector.load %arg4[%c0_4, %c0_5, %c0_6, %c0_7] : memref<1x2x256x64xbf16, #tpu.memory_space<vmem>>, vector<1x1x256x64xbf16>
    %7 = vector.shape_cast %6 : vector<1x1x256x64xbf16> to vector<256x64xbf16>
    %8 = vector.shape_cast %5 : vector<256x64xbf16> to vector<1x1x256x64xbf16>
    tpu.vector_store %arg4[%c0_4, %c0_5, %c0_6, %c0_7], %8 {strides = array<i32>} : memref<1x2x256x64xbf16, #tpu.memory_space<vmem>>, vector<1x1x256x64xbf16>,
    %9 = vector.extract_strided_slice %3 {offsets = [0, 128], sizes = [256, 64], strides = [1, 1]} : vector<256x384xf32> to vector<256x64xf32>
    %10 = arith.truncf %9 : vector<256x64xf32> to vector<256x64xbf16>
    %c0_8 = arith.constant 0 : index
    %c0_9 = arith.constant 0 : index
    %c0_10 = arith.constant 0 : index
    %c0_11 = arith.constant 0 : index
    %11 = vector.load %arg5[%c0_8, %c0_9, %c0_10, %c0_11] : memref<1x2x256x64xbf16, #tpu.memory_space<vmem>>, vector<1x1x256x64xbf16>
    %12 = vector.shape_cast %11 : vector<1x1x256x64xbf16> to vector<256x64xbf16>
    %13 = vector.shape_cast %10 : vector<256x64xbf16> to vector<1x1x256x64xbf16>
    tpu.vector_store %arg5[%c0_8, %c0_9, %c0_10, %c0_11], %13 {strides = array<i32>} : memref<1x2x256x64xbf16, #tpu.memory_space<vmem>>, vector<1x1x256x64xbf16>,
    %14 = vector.extract_strided_slice %3 {offsets = [0, 256], sizes = [256, 64], strides = [1, 1]} : vector<256x384xf32> to vector<256x64xf32>
    %15 = arith.truncf %14 : vector<256x64xf32> to vector<256x64xbf16>
    %c0_12 = arith.constant 0 : index
    %c0_13 = arith.constant 0 : index
    %c0_14 = arith.constant 0 : index
    %c0_15 = arith.constant 0 : index
    %16 = vector.load %arg6[%c0_12, %c0_13, %c0_14, %c0_15] : memref<1x2x256x64xbf16, #tpu.memory_space<vmem>>, vector<1x1x256x64xbf16>
    %17 = vector.shape_cast %16 : vector<1x1x256x64xbf16> to vector<256x64xbf16>
    %18 = vector.shape_cast %15 : vector<256x64xbf16> to vector<1x1x256x64xbf16>
    tpu.vector_store %arg6[%c0_12, %c0_13, %c0_14, %c0_15], %18 {strides = array<i32>} : memref<1x2x256x64xbf16, #tpu.memory_space<vmem>>, vector<1x1x256x64xbf16>,
    %19 = vector.extract_strided_slice %3 {offsets = [0, 64], sizes = [256, 64], strides = [1, 1]} : vector<256x384xf32> to vector<256x64xf32>
    %20 = arith.truncf %19 : vector<256x64xf32> to vector<256x64xbf16>
    %c0_16 = arith.constant 0 : index
    %c1 = arith.constant 1 : index
    %c0_17 = arith.constant 0 : index
    %c0_18 = arith.constant 0 : index
    %21 = vector.load %arg4[%c0_16, %c1, %c0_17, %c0_18] : memref<1x2x256x64xbf16, #tpu.memory_space<vmem>>, vector<1x1x256x64xbf16>
    %22 = vector.shape_cast %21 : vector<1x1x256x64xbf16> to vector<256x64xbf16>
    %23 = vector.shape_cast %20 : vector<256x64xbf16> to vector<1x1x256x64xbf16>
    tpu.vector_store %arg4[%c0_16, %c1, %c0_17, %c0_18], %23 {strides = array<i32>} : memref<1x2x256x64xbf16, #tpu.memory_space<vmem>>, vector<1x1x256x64xbf16>,
    %24 = vector.extract_strided_slice %3 {offsets = [0, 192], sizes = [256, 64], strides = [1, 1]} : vector<256x384xf32> to vector<256x64xf32>
    %25 = arith.truncf %24 : vector<256x64xf32> to vector<256x64xbf16>
    %c0_19 = arith.constant 0 : index
    %c1_20 = arith.constant 1 : index
    %c0_21 = arith.constant 0 : index
    %c0_22 = arith.constant 0 : index
    %26 = vector.load %arg5[%c0_19, %c1_20, %c0_21, %c0_22] : memref<1x2x256x64xbf16, #tpu.memory_space<vmem>>, vector<1x1x256x64xbf16>
    %27 = vector.shape_cast %26 : vector<1x1x256x64xbf16> to vector<256x64xbf16>
    %28 = vector.shape_cast %25 : vector<256x64xbf16> to vector<1x1x256x64xbf16>
    tpu.vector_store %arg5[%c0_19, %c1_20, %c0_21, %c0_22], %28 {strides = array<i32>} : memref<1x2x256x64xbf16, #tpu.memory_space<vmem>>, vector<1x1x256x64xbf16>,
    %29 = vector.extract_strided_slice %3 {offsets = [0, 320], sizes = [256, 64], strides = [1, 1]} : vector<256x384xf32> to vector<256x64xf32>
    %30 = arith.truncf %29 : vector<256x64xf32> to vector<256x64xbf16>
    %c0_23 = arith.constant 0 : index
    %c1_24 = arith.constant 1 : index
    %c0_25 = arith.constant 0 : index
    %c0_26 = arith.constant 0 : index
    %31 = vector.load %arg6[%c0_23, %c1_24, %c0_25, %c0_26] : memref<1x2x256x64xbf16, #tpu.memory_space<vmem>>, vector<1x1x256x64xbf16>
    %32 = vector.shape_cast %31 : vector<1x1x256x64xbf16> to vector<256x64xbf16>
    %33 = vector.shape_cast %30 : vector<256x64xbf16> to vector<1x1x256x64xbf16>
    tpu.vector_store %arg6[%c0_23, %c1_24, %c0_25, %c0_26], %33 {strides = array<i32>} : memref<1x2x256x64xbf16, #tpu.memory_space<vmem>>, vector<1x1x256x64xbf16>,
    return
  }
  func.func @transform_0(%arg0: i32, %arg1: i32) -> (i32, i32, i32) {
    %c0_i32 = arith.constant 0 : i32
    %c0_i32_0 = arith.constant 0 : i32
    return %arg0, %arg1, %c0_i32 : i32, i32, i32
  }
  func.func @transform_1(%arg0: i32, %arg1: i32) -> (i32, i32) {
    %c0_i32 = arith.constant 0 : i32
    %c0_i32_0 = arith.constant 0 : i32
    %c0_i32_1 = arith.constant 0 : i32
    return %c0_i32, %c0_i32_0 : i32, i32
  }
  func.func @transform_2(%arg0: i32, %arg1: i32) -> (i32, i32, i32, i32) {
    %c0_i32 = arith.constant 0 : i32
    %c0_i32_0 = arith.constant 0 : i32
    %c0_i32_1 = arith.constant 0 : i32
    return %arg0, %c0_i32, %arg1, %c0_i32_0 : i32, i32, i32, i32
  }
  func.func @transform_3(%arg0: i32, %arg1: i32) -> (i32, i32, i32, i32) {
    %c0_i32 = arith.constant 0 : i32
    %c0_i32_0 = arith.constant 0 : i32
    %c0_i32_1 = arith.constant 0 : i32
    return %arg0, %c0_i32, %arg1, %c0_i32_0 : i32, i32, i32, i32
  }
  func.func @transform_4(%arg0: i32, %arg1: i32) -> (i32, i32, i32, i32) {
    %c0_i32 = arith.constant 0 : i32
    %c0_i32_0 = arith.constant 0 : i32
    %c0_i32_1 = arith.constant 0 : i32
    return %arg0, %c0_i32, %arg1, %c0_i32_0 : i32, i32, i32, i32
  }
}

</mosaic_0001>

<llo_original>
// kernel: tpu_custom_call.1
$region0: #{tpu_custom_call.1}
  #allocation0 [shape = 'u32[]', space=smem, size = 0x4, offset = 0x4, fixed_abs, tag = 'smem constant byte address 0x4 - core index']
  #allocation1 [shape = 'u32[144,128]{1,0:T(1,128)}', space=vmem, size = 0x12000, scoped, tag = 'internal scratch']
  %s0 = inlined_call_operand.vmem [shape: bf16[2,256,64], index: 0, kind: input, shape index: {}]
  %s1 = inlined_call_operand.vmem [shape: bf16[64,384], index: 1, kind: input, shape index: {}]
  %s2 = inlined_call_operand.vmem [shape: bf16[2,2,256,64], index: 2, kind: output, shape index: {0}]
  %s3 = inlined_call_operand.vmem [shape: bf16[2,2,256,64], index: 3, kind: output, shape index: {1}]
  %s4 = inlined_call_operand.vmem [shape: bf16[2,2,256,64], index: 4, kind: output, shape index: {2}]
  %5 = xla_tuple %s2, %s3, %s4
  %s6 = sld [smem:[#allocation0]]
  $region57: #{tpu_custom_call.1} parent=0
    _
  %s8 = ssub.s32 1, %s6
  %s9 = scalar_select 0, %s8, %s6
  loop: start=0, step=1, limit=4
  $region2: #{tpu_custom_call.1} parent=0 // loop_pre_header
    _
  $region3: #{tpu_custom_call.1} parent=0 // loop_header
    %s11 = sphi 0, %s15
    %p12 = scmp.ge.s32.totalorder %s11, 4
    %s18 = sphi 0, %s30
    %s19 = sphi 0, %s26
    %s20 = sphi 0, %s18
    %s21 = sphi 0, %s19
    %s22 = sphi 0, %s20
    %s23 = sphi 0, %s21
    %s35 = sphi 0, %s37
    %s38 = sphi 0, %s35
    %s39 = sphi 0, %s38
    %s55 = sphi 0, %s39
    %s59 = sphi 0, %s59
    %s61 = sphi 0, %s59
    %s62 = sphi 0, %s61
    %s76 = sphi 0, %s62
    %s84 = sphi 0, %s86
    %s87 = sphi 0, %s84
    %s88 = sphi 0, %s87
    %s104 = sphi 0, %s88
    %s112 = sphi 0, %s114
    %s115 = sphi 0, %s112
    %s116 = sphi 0, %s115
    %s132 = sphi 0, %s116
    %s140 = sphi 0, %s142
    %s143 = sphi 0, %s140
    %s144 = sphi 0, %s143
    %s160 = sphi 0, %s144
  $region4: #{tpu_custom_call.1} parent=0 // loop_header_branch
    %14 = sbr.rel (%p12) target = $region8
  $region5: #{tpu_custom_call.1} parent=0 // loop_body
    %s16 = ssub.s32 %s11, 1
    %s17 = ssub.s32 %s11, 2
    %s24 = sadd.s32 1, %s19
    %p25 = scmp.ge.s32.totalorder %s24, 1
    %s26 = scalar_select %p25, 0, %s24
    %s27 = sadd.s32 1, %s18
    %s28 = scalar_select %p25, %s27, %s18
    %p29 = scmp.ge.s32.totalorder %s28, 2
    %s30 = scalar_select %p29, 0, %s28
    %s31 = ssub.s32 %s18, %s30
    %s32 = ssub.s32 %s19, %s26
    %s33 = sor.u32 %s31, %s32
    %p34 = scmp.eq.s32.totalorder %s33, 0
    %s36 = sadd.s32 %s35, 1
    %s37 = scalar_select %p34, %s35, %s36
    %p40 = pneg %p34
    %p41 = scmp.eq.s32.totalorder %s11, 1
    %p42 = por %p40, %p41
    %p43 = scmp.ne.s32.totalorder %s35, %s38
    %p44 = scmp.eq.s32.totalorder %s11, 0
    %p45 = por %p43, %p44
    %p46 = scmp.ne.s32.totalorder %s35, %s38
    %p47 = scmp.eq.s32.totalorder %s16, 1
    %p48 = por %p46, %p47
    %p49 = scmp.ne.s32.totalorder %s38, %s39
    %p50 = scmp.eq.s32.totalorder %s16, 0
    %p51 = por %p49, %p50
    %p52 = scmp.ne.s32.totalorder %s38, %s39
    %p53 = scmp.eq.s32.totalorder %s17, 1
    %p54 = por %p52, %p53
    %p56 = scmp.ne.s32.totalorder %s39, %s55
    %p57 = scmp.eq.s32.totalorder %s17, 0
    %p58 = por %p56, %p57
    %s60 = sadd.s32 %s59, 1
    %p63 = scmp.eq.s32.totalorder %s11, 1
    %p64 = scmp.ne.s32.totalorder %s59, %s61
    %p65 = scmp.eq.s32.totalorder %s11, 0
    %p66 = por %p64, %p65
    %p67 = scmp.ne.s32.totalorder %s59, %s61
    %p68 = scmp.eq.s32.totalorder %s16, 1
    %p69 = por %p67, %p68
    %p70 = scmp.ne.s32.totalorder %s61, %s62
    %p71 = scmp.eq.s32.totalorder %s16, 0
    %p72 = por %p70, %p71
    %p73 = scmp.ne.s32.totalorder %s61, %s62
    %p74 = scmp.eq.s32.totalorder %s17, 1
    %p75 = por %p73, %p74
    %p77 = scmp.ne.s32.totalorder %s62, %s76
    %p78 = scmp.eq.s32.totalorder %s17, 0
    %p79 = por %p77, %p78
    %s80 = ssub.s32 %s18, %s30
    %s81 = ssub.s32 %s19, %s26
    %s82 = sor.u32 %s80, %s81
    %p83 = scmp.eq.s32.totalorder %s82, 0
    %s85 = sadd.s32 %s84, 1
    %s86 = scalar_select %p83, %s84, %s85
    %p89 = pneg %p83
    %p90 = scmp.eq.s32.totalorder %s11, 1
    %p91 = por %p89, %p90
    %p92 = scmp.ne.s32.totalorder %s84, %s87
    %p93 = scmp.eq.s32.totalorder %s11, 0
    %p94 = por %p92, %p93
    %p95 = scmp.ne.s32.totalorder %s84, %s87
    %p96 = scmp.eq.s32.totalorder %s16, 1
    %p97 = por %p95, %p96
    %p98 = scmp.ne.s32.totalorder %s87, %s88
    %p99 = scmp.eq.s32.totalorder %s16, 0
    %p100 = por %p98, %p99
    %p101 = scmp.ne.s32.totalorder %s87, %s88
    %p102 = scmp.eq.s32.totalorder %s17, 1
    %p103 = por %p101, %p102
    %p105 = scmp.ne.s32.totalorder %s88, %s104
    %p106 = scmp.eq.s32.totalorder %s17, 0
    %p107 = por %p105, %p106
    %s108 = ssub.s32 %s18, %s30
    %s109 = ssub.s32 %s19, %s26
    %s110 = sor.u32 %s108, %s109
    %p111 = scmp.eq.s32.totalorder %s110, 0
    %s113 = sadd.s32 %s112, 1
    %s114 = scalar_select %p111, %s112, %s113
    %p117 = pneg %p111
    %p118 = scmp.eq.s32.totalorder %s11, 1
    %p119 = por %p117, %p118
    %p120 = scmp.ne.s32.totalorder %s112, %s115
    %p121 = scmp.eq.s32.totalorder %s11, 0
    %p122 = por %p120, %p121
    %p123 = scmp.ne.s32.totalorder %s112, %s115
    %p124 = scmp.eq.s32.totalorder %s16, 1
    %p125 = por %p123, %p124
    %p126 = scmp.ne.s32.totalorder %s115, %s116
    %p127 = scmp.eq.s32.totalorder %s16, 0
    %p128 = por %p126, %p127
    %p129 = scmp.ne.s32.totalorder %s115, %s116
    %p130 = scmp.eq.s32.totalorder %s17, 1
    %p131 = por %p129, %p130
    %p133 = scmp.ne.s32.totalorder %s116, %s132
    %p134 = scmp.eq.s32.totalorder %s17, 0
    %p135 = por %p133, %p134
    %s136 = ssub.s32 %s18, %s30
    %s137 = ssub.s32 %s19, %s26
    %s138 = sor.u32 %s136, %s137
    %p139 = scmp.eq.s32.totalorder %s138, 0
    %s141 = sadd.s32 %s140, 1
    %s142 = scalar_select %p139, %s140, %s141
    %p145 = pneg %p139
    %p146 = scmp.eq.s32.totalorder %s11, 1
    %p147 = por %p145, %p146
    %p148 = scmp.ne.s32.totalorder %s140, %s143
    %p149 = scmp.eq.s32.totalorder %s11, 0
    %p150 = por %p148, %p149
    %p151 = scmp.ne.s32.totalorder %s140, %s143
    %p152 = scmp.eq.s32.totalorder %s16, 1
    %p153 = por %p151, %p152
    %p154 = scmp.ne.s32.totalorder %s143, %s144
    %p155 = scmp.eq.s32.totalorder %s16, 0
    %p156 = por %p154, %p155
    %p157 = scmp.ne.s32.totalorder %s143, %s144
    %p158 = scmp.eq.s32.totalorder %s17, 1
    %p159 = por %p157, %p158
    %p161 = scmp.ne.s32.totalorder %s144, %s160
    %p162 = scmp.eq.s32.totalorder %s17, 0
    %p163 = por %p161, %p162
    %p164 = scmp.le.s32.totalorder 1, %s11
    %p165 = scmp.lt.s32.totalorder %s11, 3
    %p166 = pnand %p164, %p165
    %p167 = pneg %p166
    // Predicated region
    $region9: #{tpu_custom_call.1} parent=5 // pred_check
      _
    $region10: #{tpu_custom_call.1} parent=5 // pred_check_branch
      %169 = sbr.rel (%p166) target = $region12
    $region11: #{tpu_custom_call.1} parent=5 // pred_region
      %s170 = ssub.s32 %s11, 1
      // Predicated region
      $region13: #{tpu_custom_call.1} parent=11 // pred_check
        %p171 = pneg %p72
      $region14: #{tpu_custom_call.1} parent=11 // pred_check_branch
        %173 = sbr.rel (%p171) target = $region16
      $region15: #{tpu_custom_call.1} parent=11 // pred_region
        _
      $region16: #{tpu_custom_call.1} parent=11 // pred_fallthru
        _
    $region12: #{tpu_custom_call.1} parent=5 // pred_fallthru
      _
    %p174 = scmp.lt.s32.totalorder %s11, 2
    // Predicated region
    $region17: #{tpu_custom_call.1} parent=5 // pred_check
      %p175 = pneg %p174
    $region18: #{tpu_custom_call.1} parent=5 // pred_check_branch
      %177 = sbr.rel (%p175) target = $region20
    $region19: #{tpu_custom_call.1} parent=5 // pred_region
      // Predicated region
      $region21: #{tpu_custom_call.1} parent=19 // pred_check
        %p178 = pneg %p45
      $region22: #{tpu_custom_call.1} parent=19 // pred_check_branch
        %180 = sbr.rel (%p178) target = $region24
      $region23: #{tpu_custom_call.1} parent=19 // pred_region
        %s181 = smul.u32 32, %s19
        %p182 = scmp.lt.s32.totalorder %s18, 1
        %s183 = scalar_select %p182, %s18, 1
        %p184 = scmp.lt.s32.totalorder %s181, 31
        %s185 = scalar_select %p184, %s181, 31
        %s186 = smul.addr %s183, 32
        %s187 = sadd.s32 %s185, %s186
        %s188 = smul.addr %s187, 4
        %s189 = scalar_lea.vmem %s0, %s188
        %s190 = smul.u32 32, %s19
      $region24: #{tpu_custom_call.1} parent=19 // pred_fallthru
        _
    $region20: #{tpu_custom_call.1} parent=5 // pred_fallthru
      _
    %p191 = scmp.le.s32.totalorder 1, %s11
    %p192 = scmp.lt.s32.totalorder %s11, 3
    %p193 = pnand %p191, %p192
    %p194 = pneg %p193
    // Predicated region
    $region25: #{tpu_custom_call.1} parent=5 // pred_check
      _
    $region26: #{tpu_custom_call.1} parent=5 // pred_check_branch
      %196 = sbr.rel (%p193) target = $region28
    $region27: #{tpu_custom_call.1} parent=5 // pred_region
      %s197 = ssub.s32 %s11, 1
      %s198 = smul.u32 32, %s21
      %p199 = scmp.lt.s32.totalorder %s20, 1
      %s200 = scalar_select %p199, %s20, 1
      %p201 = scmp.lt.s32.totalorder %s198, 31
      %s202 = scalar_select %p201, %s198, 31
      %s203 = smul.addr %s200, 32
      %s204 = sadd.s32 %s202, %s203
      %s205 = smul.addr %s204, 4
      %s206 = scalar_lea.vmem %s0, %s205
      %p207 = pneg %p51
      %p208 = pneg %p48
      %p209 = pneg %p72
      %p210 = pneg %p69
      %p211 = pneg %p100
      %p212 = pneg %p97
      %s213 = smul.u32 32, %s21
      %p214 = scmp.lt.s32.totalorder %s20, 1
      %s215 = scalar_select %p214, %s20, 1
      %p216 = scmp.lt.s32.totalorder %s213, 31
      %s217 = scalar_select %p216, %s213, 31
      %s218 = smul.addr %s215, 64
      %s219 = sadd.s32 %s217, %s218
      %s220 = smul.addr %s219, 4
      %s221 = scalar_lea.vmem %s2, %s220
      %p222 = pneg %p128
      %p223 = pneg %p125
      %s224 = smul.u32 32, %s21
      %p225 = scmp.lt.s32.totalorder %s20, 1
      %s226 = scalar_select %p225, %s20, 1
      %p227 = scmp.lt.s32.totalorder %s224, 31
      %s228 = scalar_select %p227, %s224, 31
      %s229 = smul.addr %s226, 64
      %s230 = sadd.s32 %s228, %s229
      %s231 = smul.addr %s230, 4
      %s232 = scalar_lea.vmem %s3, %s231
      %p233 = pneg %p156
      %p234 = pneg %p153
      %s235 = smul.u32 32, %s21
      %p236 = scmp.lt.s32.totalorder %s20, 1
      %s237 = scalar_select %p236, %s20, 1
      %p238 = scmp.lt.s32.totalorder %s235, 31
      %s239 = scalar_select %p238, %s235, 31
      %s240 = smul.addr %s237, 64
      %s241 = sadd.s32 %s239, %s240
      %s242 = smul.addr %s241, 4
      %s243 = scalar_lea.vmem %s4, %s242
      %s244 = smul.u32 32, %s21
      %p245 = scmp.lt.s32.totalorder %s20, 1
      %s246 = scalar_select %p245, %s20, 1
      %p247 = scmp.lt.s32.totalorder %s244, 31
      %s248 = scalar_select %p247, %s244, 31
      %s249 = smul.addr %s246, 32
      %s250 = sadd.s32 %s248, %s249
      %s251 = smul.addr %s250, 4
      %s252 = scalar_lea.vmem %s0, %s251
      %s253 = smul.u32 32, %s21
      %s254 = smul.u32 32, %s21
      %p255 = scmp.lt.s32.totalorder %s20, 1
      %s256 = scalar_select %p255, %s20, 1
      %p257 = scmp.lt.s32.totalorder %s254, 31
      %s258 = scalar_select %p257, %s254, 31
      %s259 = smul.addr %s256, 64
      %s260 = sadd.s32 %s258, %s259
      %s261 = smul.addr %s260, 4
      %s262 = scalar_lea.vmem %s2, %s261
      %s263 = smul.u32 32, %s21
      %s264 = smul.u32 32, %s21
      %p265 = scmp.lt.s32.totalorder %s20, 1
      %s266 = scalar_select %p265, %s20, 1
      %p267 = scmp.lt.s32.totalorder %s264, 31
      %s268 = scalar_select %p267, %s264, 31
      %s269 = smul.addr %s266, 64
      %s270 = sadd.s32 %s268, %s269
      %s271 = smul.addr %s270, 4
      %s272 = scalar_lea.vmem %s3, %s271
      %s273 = smul.u32 32, %s21
      %s274 = smul.u32 32, %s21
      %p275 = scmp.lt.s32.totalorder %s20, 1
      %s276 = scalar_select %p275, %s20, 1
      %p277 = scmp.lt.s32.totalorder %s274, 31
      %s278 = scalar_select %p277, %s274, 31
      %s279 = smul.addr %s276, 64
      %s280 = sadd.s32 %s278, %s279
      %s281 = smul.addr %s280, 4
      %s282 = scalar_lea.vmem %s4, %s281
      %s283 = smul.u32 32, %s21
      %v285 = vld [vmem:[%s252] sm:$0xf]
      %v286 = vld [vmem:[%s252 + $0x4] sm:$0xf]
      %v287 = vld [vmem:[%s252 + $0x8] sm:$0xf]
      %v288 = vld [vmem:[%s252 + $0xc] sm:$0xf]
      %v289 = vld [vmem:[%s252 + $0x10] sm:$0xf]
      %v290 = vld [vmem:[%s252 + $0x14] sm:$0xf]
      %v291 = vld [vmem:[%s252 + $0x18] sm:$0xf]
      %v292 = vld [vmem:[%s252 + $0x1c] sm:$0xf]
      %v293 = vld [vmem:[%s252 + $0x20] sm:$0xf]
      %v294 = vld [vmem:[%s252 + $0x24] sm:$0xf]
      %v295 = vld [vmem:[%s252 + $0x28] sm:$0xf]
      %v296 = vld [vmem:[%s252 + $0x2c] sm:$0xf]
      %v297 = vld [vmem:[%s252 + $0x30] sm:$0xf]
      %v298 = vld [vmem:[%s252 + $0x34] sm:$0xf]
      %v299 = vld [vmem:[%s252 + $0x38] sm:$0xf]
      %v300 = vld [vmem:[%s252 + $0x3c] sm:$0xf]
      %v301 = vld [vmem:[%s252 + $0x40] sm:$0xf]
      %v302 = vld [vmem:[%s252 + $0x44] sm:$0xf]
      %v303 = vld [vmem:[%s252 + $0x48] sm:$0xf]
      %v304 = vld [vmem:[%s252 + $0x4c] sm:$0xf]
      %v305 = vld [vmem:[%s252 + $0x50] sm:$0xf]
      %v306 = vld [vmem:[%s252 + $0x54] sm:$0xf]
      %v307 = vld [vmem:[%s252 + $0x58] sm:$0xf]
      %v308 = vld [vmem:[%s252 + $0x5c] sm:$0xf]
      %v309 = vld [vmem:[%s252 + $0x60] sm:$0xf]
      %v310 = vld [vmem:[%s252 + $0x64] sm:$0xf]
      %v311 = vld [vmem:[%s252 + $0x68] sm:$0xf]
      %v312 = vld [vmem:[%s252 + $0x6c] sm:$0xf]
      %v313 = vld [vmem:[%s252 + $0x70] sm:$0xf]
      %v314 = vld [vmem:[%s252 + $0x74] sm:$0xf]
      %v315 = vld [vmem:[%s252 + $0x78] sm:$0xf]
      %v316 = vld [vmem:[%s252 + $0x7c] sm:$0xf]
      %v317 = vld [vmem:[%s1] sm:$0xff]
      %v318 = vld [vmem:[%s1 + $0x8] sm:$0xf]
      %v319 = vld [vmem:[%s1 + $0xc] sm:$0xff]
      %v320 = vld [vmem:[%s1 + $0x14] sm:$0xf]
      %v321 = vld [vmem:[%s1 + $0x18] sm:$0xff]
      %v322 = vld [vmem:[%s1 + $0x20] sm:$0xf]
      %v323 = vld [vmem:[%s1 + $0x24] sm:$0xff]
      %v324 = vld [vmem:[%s1 + $0x2c] sm:$0xf]
      %v325 = vld [vmem:[%s1 + $0x30] sm:$0xff]
      %v326 = vld [vmem:[%s1 + $0x38] sm:$0xf]
      %v327 = vld [vmem:[%s1 + $0x3c] sm:$0xff]
      %v328 = vld [vmem:[%s1 + $0x44] sm:$0xf]
      %v329 = vld [vmem:[%s1 + $0x48] sm:$0xff]
      %v330 = vld [vmem:[%s1 + $0x50] sm:$0xf]
      %v331 = vld [vmem:[%s1 + $0x54] sm:$0xff]
      %v332 = vld [vmem:[%s1 + $0x5c] sm:$0xf]
      %v365 = vunpack.c.l.b16 %v285
      %v366 = vunpack.c.l.b16 %v286
      %v367 = vunpack.c.l.b16 %v287
      %v368 = vunpack.c.l.b16 %v288
      %v369 = vunpack.c.l.b16 %v289
      %v370 = vunpack.c.l.b16 %v290
      %v371 = vunpack.c.l.b16 %v291
      %v372 = vunpack.c.l.b16 %v292
      %v373 = vunpack.c.l.b16 %v293
      %v374 = vunpack.c.l.b16 %v294
      %v375 = vunpack.c.l.b16 %v295
      %v376 = vunpack.c.l.b16 %v296
      %v377 = vunpack.c.l.b16 %v297
      %v378 = vunpack.c.l.b16 %v298
      %v379 = vunpack.c.l.b16 %v299
      %v380 = vunpack.c.l.b16 %v300
      %v381 = vunpack.c.l.b16 %v301
      %v382 = vunpack.c.l.b16 %v302
      %v383 = vunpack.c.l.b16 %v303
      %v384 = vunpack.c.l.b16 %v304
      %v385 = vunpack.c.l.b16 %v305
      %v386 = vunpack.c.l.b16 %v306
      %v387 = vunpack.c.l.b16 %v307
      %v388 = vunpack.c.l.b16 %v308
      %v389 = vunpack.c.l.b16 %v309
      %v390 = vunpack.c.l.b16 %v310
      %v391 = vunpack.c.l.b16 %v311
      %v392 = vunpack.c.l.b16 %v312
      %v393 = vunpack.c.l.b16 %v313
      %v394 = vunpack.c.l.b16 %v314
      %v395 = vunpack.c.l.b16 %v315
      %v396 = vunpack.c.l.b16 %v316
      %v397 = vpack.c.b16 %v366, %v365
      %v398 = vpack.c.b16 %v368, %v367
      %v399 = vpack.c.b16 %v370, %v369
      %v400 = vpack.c.b16 %v372, %v371
      %v401 = vpack.c.b16 %v374, %v373
      %v402 = vpack.c.b16 %v376, %v375
      %v403 = vpack.c.b16 %v378, %v377
      %v404 = vpack.c.b16 %v380, %v379
      %v405 = vpack.c.b16 %v382, %v381
      %v406 = vpack.c.b16 %v384, %v383
      %v407 = vpack.c.b16 %v386, %v385
      %v408 = vpack.c.b16 %v388, %v387
      %v409 = vpack.c.b16 %v390, %v389
      %v410 = vpack.c.b16 %v392, %v391
      %v411 = vpack.c.b16 %v394, %v393
      %v412 = vpack.c.b16 %v396, %v395
      %v429 = vunpack.c.l.b16 %v317
      %v430 = vunpack.c.h.b16 %v317
      %v431 = vunpack.c.l.b16 %v318
      %v432 = vunpack.c.l.b16 %v319
      %v433 = vunpack.c.h.b16 %v319
      %v434 = vunpack.c.l.b16 %v320
      %v435 = vunpack.c.l.b16 %v321
      %v436 = vunpack.c.h.b16 %v321
      %v437 = vunpack.c.l.b16 %v322
      %v438 = vunpack.c.l.b16 %v323
      %v439 = vunpack.c.h.b16 %v323
      %v440 = vunpack.c.l.b16 %v324
      %v441 = vunpack.c.l.b16 %v325
      %v442 = vunpack.c.h.b16 %v325
      %v443 = vunpack.c.l.b16 %v326
      %v444 = vunpack.c.l.b16 %v327
      %v445 = vunpack.c.h.b16 %v327
      %v446 = vunpack.c.l.b16 %v328
      %v447 = vunpack.c.l.b16 %v329
      %v448 = vunpack.c.h.b16 %v329
      %v449 = vunpack.c.l.b16 %v330
      %v450 = vunpack.c.l.b16 %v331
      %v451 = vunpack.c.h.b16 %v331
      %v452 = vunpack.c.l.b16 %v332
      %v453 = vpack.c.b16 %v432, %v429
      %v454 = vpack.c.b16 %v433, %v430
      %v455 = vpack.c.b16 %v434, %v431
      %v456 = vpack.c.b16 %v438, %v435
      %v457 = vpack.c.b16 %v439, %v436
      %v458 = vpack.c.b16 %v440, %v437
      %v459 = vpack.c.b16 %v444, %v441
      %v460 = vpack.c.b16 %v445, %v442
      %v461 = vpack.c.b16 %v446, %v443
      %v462 = vpack.c.b16 %v450, %v447
      %v463 = vpack.c.b16 %v451, %v448
      %v464 = vpack.c.b16 %v452, %v449
      %vm477 = vcmask 523264
      %v479 = vsel %vm477, %v397, 0
      %v482 = vsel %vm477, %v398, 0
      %v485 = vsel %vm477, %v399, 0
      %v488 = vsel %vm477, %v400, 0
      %v491 = vsel %vm477, %v401, 0
      %v494 = vsel %vm477, %v402, 0
      %v497 = vsel %vm477, %v403, 0
      %v500 = vsel %vm477, %v404, 0
      %v503 = vsel %vm477, %v405, 0
      %v506 = vsel %vm477, %v406, 0
      %v509 = vsel %vm477, %v407, 0
      %v512 = vsel %vm477, %v408, 0
      %v515 = vsel %vm477, %v409, 0
      %v518 = vsel %vm477, %v410, 0
      %v521 = vsel %vm477, %v411, 0
      %v524 = vsel %vm477, %v412, 0
      %526 = vmatprep.subr.bf16.mxu0 0
      %527 = vmatpush1.bf16.msra.mxu0 0
      %528 = vmatprep.subr.bf16.mxu0 0
      %529 = vmatpush1.bf16.msra.mxu0 0
      %530 = vmatprep.subr.bf16.mxu0 0
      %531 = vmatpush1.bf16.msra.mxu0 0
      %532 = vmatprep.subr.bf16.mxu0 0
      %533 = vmatpush1.bf16.msra.mxu0 0
      %534 = vmatprep.subr.bf16.mxu0 %v463
      %535 = vmatpush1.bf16.msra.mxu0 %v462
      %536 = vmatprep.subr.bf16.mxu0 %v460
      %537 = vmatpush1.bf16.msra.mxu0 %v459
      %538 = vmatprep.subr.bf16.mxu0 %v457
      %539 = vmatpush1.bf16.msra.mxu0 %v456
      %540 = vmatprep.subr.bf16.mxu0 %v454
      %541 = vmatpush1.bf16.msra.mxu0 %v453
      %542 = vmatprep.subr.bf16.mxu0 0
      %543 = vmatpush2.bf16.msra.mxu0 0
      %544 = vmatprep.subr.bf16.mxu0 0
      %545 = vmatpush2.bf16.msra.mxu0 0
      %546 = vmatprep.subr.bf16.mxu0 0
      %547 = vmatpush2.bf16.msra.mxu0 0
      %548 = vmatprep.subr.bf16.mxu0 0
      %549 = vmatpush2.bf16.msra.mxu0 0
      %550 = vmatprep.subr.bf16.mxu0 0
      %551 = vmatpush2.bf16.msra.mxu0 0
      %552 = vmatprep.subr.bf16.mxu0 0
      %553 = vmatpush2.bf16.msra.mxu0 0
      %554 = vmatprep.subr.bf16.mxu0 0
      %555 = vmatpush2.bf16.msra.mxu0 0
      %556 = vmatprep.subr.bf16.mxu0 0
      %557 = vmatpush2.bf16.msra.mxu0 0
      %558 = vmatprep.mubr.bf16.mxu0 0
      %559 = vmatmul.mubr.bf16.gmra.mxu0 %v479
      %v560 = vpop.f32.mrf.mxu0
      %v561 = vadd.f32 0.0, %v560
      %v562 = vpop.f32.mrf.mxu0
      %v563 = vadd.f32 0.0, %v562
      %v564 = vpop.f32.mrf.mxu0
      %v565 = vadd.f32 0.0, %v564
      %v566 = vpop.f32.mrf.mxu0
      %v567 = vadd.f32 0.0, %v566
      %568 = vmatprep.mubr.bf16.mxu0 0
      %569 = vmatmul.mubr.bf16.gmra.mxu0 %v482
      %v570 = vpop.f32.mrf.mxu0
      %v571 = vadd.f32 0.0, %v570
      %v572 = vpop.f32.mrf.mxu0
      %v573 = vadd.f32 0.0, %v572
      %v574 = vpop.f32.mrf.mxu0
      %v575 = vadd.f32 0.0, %v574
      %v576 = vpop.f32.mrf.mxu0
      %v577 = vadd.f32 0.0, %v576
      %578 = vmatprep.mubr.bf16.mxu0 0
      %579 = vmatmul.mubr.bf16.gmra.mxu0 %v485
      %v580 = vpop.f32.mrf.mxu0
      %v581 = vadd.f32 0.0, %v580
      %v582 = vpop.f32.mrf.mxu0
      %v583 = vadd.f32 0.0, %v582
      %v584 = vpop.f32.mrf.mxu0
      %v585 = vadd.f32 0.0, %v584
      %v586 = vpop.f32.mrf.mxu0
      %v587 = vadd.f32 0.0, %v586
      %588 = vmatprep.mubr.bf16.mxu0 0
      %589 = vmatmul.mubr.bf16.gmra.mxu0 %v488
      %v590 = vpop.f32.mrf.mxu0
      %v591 = vadd.f32 0.0, %v590
      %v592 = vpop.f32.mrf.mxu0
      %v593 = vadd.f32 0.0, %v592
      %v594 = vpop.f32.mrf.mxu0
      %v595 = vadd.f32 0.0, %v594
      %v596 = vpop.f32.mrf.mxu0
      %v597 = vadd.f32 0.0, %v596
      %598 = vmatprep.mubr.bf16.mxu0 0
      %599 = vmatmul.mubr.bf16.gmra.mxu0 %v491
      %v600 = vpop.f32.mrf.mxu0
      %v601 = vadd.f32 0.0, %v600
      %v602 = vpop.f32.mrf.mxu0
      %v603 = vadd.f32 0.0, %v602
      %v604 = vpop.f32.mrf.mxu0
      %v605 = vadd.f32 0.0, %v604
      %v606 = vpop.f32.mrf.mxu0
      %v607 = vadd.f32 0.0, %v606
      %608 = vmatprep.mubr.bf16.mxu0 0
      %609 = vmatmul.mubr.bf16.gmra.mxu0 %v494
      %v610 = vpop.f32.mrf.mxu0
      %v611 = vadd.f32 0.0, %v610
      %v612 = vpop.f32.mrf.mxu0
      %v613 = vadd.f32 0.0, %v612
      %v614 = vpop.f32.mrf.mxu0
      %v615 = vadd.f32 0.0, %v614
      %v616 = vpop.f32.mrf.mxu0
      %v617 = vadd.f32 0.0, %v616
      %618 = vmatprep.mubr.bf16.mxu0 0
      %619 = vmatmul.mubr.bf16.gmra.mxu0 %v497
      %v620 = vpop.f32.mrf.mxu0
      %v621 = vadd.f32 0.0, %v620
      %v622 = vpop.f32.mrf.mxu0
      %v623 = vadd.f32 0.0, %v622
      %v624 = vpop.f32.mrf.mxu0
      %v625 = vadd.f32 0.0, %v624
      %v626 = vpop.f32.mrf.mxu0
      %v627 = vadd.f32 0.0, %v626
      %628 = vmatprep.mubr.bf16.mxu0 0
      %629 = vmatmul.mubr.bf16.gmra.mxu0 %v500
      %v630 = vpop.f32.mrf.mxu0
      %v631 = vadd.f32 0.0, %v630
      %v632 = vpop.f32.mrf.mxu0
      %v633 = vadd.f32 0.0, %v632
      %v634 = vpop.f32.mrf.mxu0
      %v635 = vadd.f32 0.0, %v634
      %v636 = vpop.f32.mrf.mxu0
      %v637 = vadd.f32 0.0, %v636
      %638 = vmatprep.mubr.bf16.mxu0 0
      %639 = vmatmul.mubr.bf16.gmra.mxu0 %v503
      %v640 = vpop.f32.mrf.mxu0
      %v641 = vadd.f32 0.0, %v640
      %v642 = vpop.f32.mrf.mxu0
      %v643 = vadd.f32 0.0, %v642
      %v644 = vpop.f32.mrf.mxu0
      %v645 = vadd.f32 0.0, %v644
      %v646 = vpop.f32.mrf.mxu0
      %v647 = vadd.f32 0.0, %v646
      %648 = vmatprep.mubr.bf16.mxu0 0
      %649 = vmatmul.mubr.bf16.gmra.mxu0 %v506
      %v650 = vpop.f32.mrf.mxu0
      %v651 = vadd.f32 0.0, %v650
      %v652 = vpop.f32.mrf.mxu0
      %v653 = vadd.f32 0.0, %v652
      %v654 = vpop.f32.mrf.mxu0
      %v655 = vadd.f32 0.0, %v654
      %v656 = vpop.f32.mrf.mxu0
      %v657 = vadd.f32 0.0, %v656
      %658 = vmatprep.mubr.bf16.mxu0 0
      %659 = vmatmul.mubr.bf16.gmra.mxu0 %v509
      %v660 = vpop.f32.mrf.mxu0
      %v661 = vadd.f32 0.0, %v660
      %v662 = vpop.f32.mrf.mxu0
      %v663 = vadd.f32 0.0, %v662
      %v664 = vpop.f32.mrf.mxu0
      %v665 = vadd.f32 0.0, %v664
      %v666 = vpop.f32.mrf.mxu0
      %v667 = vadd.f32 0.0, %v666
      %668 = vmatprep.mubr.bf16.mxu0 0
      %669 = vmatmul.mubr.bf16.gmra.mxu0 %v512
      %v670 = vpop.f32.mrf.mxu0
      %v671 = vadd.f32 0.0, %v670
      %v672 = vpop.f32.mrf.mxu0
      %v673 = vadd.f32 0.0, %v672
      %v674 = vpop.f32.mrf.mxu0
      %v675 = vadd.f32 0.0, %v674
      %v676 = vpop.f32.mrf.mxu0
      %v677 = vadd.f32 0.0, %v676
      %678 = vmatprep.mubr.bf16.mxu0 0
      %679 = vmatmul.mubr.bf16.gmra.mxu0 %v515
      %v680 = vpop.f32.mrf.mxu0
      %v681 = vadd.f32 0.0, %v680
      %v682 = vpop.f32.mrf.mxu0
      %v683 = vadd.f32 0.0, %v682
      %v684 = vpop.f32.mrf.mxu0
      %v685 = vadd.f32 0.0, %v684
      %v686 = vpop.f32.mrf.mxu0
      %v687 = vadd.f32 0.0, %v686
      %688 = vmatprep.mubr.bf16.mxu0 0
      %689 = vmatmul.mubr.bf16.gmra.mxu0 %v518
      %v690 = vpop.f32.mrf.mxu0
      %v691 = vadd.f32 0.0, %v690
      %v692 = vpop.f32.mrf.mxu0
      %v693 = vadd.f32 0.0, %v692
      %v694 = vpop.f32.mrf.mxu0
      %v695 = vadd.f32 0.0, %v694
      %v696 = vpop.f32.mrf.mxu0
      %v697 = vadd.f32 0.0, %v696
      %698 = vmatprep.mubr.bf16.mxu0 0
      %699 = vmatmul.mubr.bf16.gmra.mxu0 %v521
      %v700 = vpop.f32.mrf.mxu0
      %v701 = vadd.f32 0.0, %v700
      %v702 = vpop.f32.mrf.mxu0
      %v703 = vadd.f32 0.0, %v702
      %v704 = vpop.f32.mrf.mxu0
      %v705 = vadd.f32 0.0, %v704
      %v706 = vpop.f32.mrf.mxu0
      %v707 = vadd.f32 0.0, %v706
      %708 = vmatprep.mubr.bf16.mxu0 0
      %709 = vmatmul.mubr.bf16.gmra.mxu0 %v524
      %v710 = vpop.f32.mrf.mxu0
      %v711 = vadd.f32 0.0, %v710
      %v712 = vpop.f32.mrf.mxu0
      %v713 = vadd.f32 0.0, %v712
      %v714 = vpop.f32.mrf.mxu0
      %v715 = vadd.f32 0.0, %v714
      %v716 = vpop.f32.mrf.mxu0
      %v717 = vadd.f32 0.0, %v716
      %718 = vdwg.mxu0
      %719 = vmatprep.subr.bf16.mxu0 0
      %720 = vmatpush1.bf16.msra.mxu0 0
      %721 = vmatprep.subr.bf16.mxu0 0
      %722 = vmatpush1.bf16.msra.mxu0 0
      %723 = vmatprep.subr.bf16.mxu0 0
      %724 = vmatpush1.bf16.msra.mxu0 0
      %725 = vmatprep.subr.bf16.mxu0 0
      %726 = vmatpush1.bf16.msra.mxu0 0
      %727 = vmatprep.subr.bf16.mxu0 0
      %728 = vmatpush1.bf16.msra.mxu0 %v464
      %729 = vmatprep.subr.bf16.mxu0 0
      %730 = vmatpush1.bf16.msra.mxu0 %v461
      %731 = vmatprep.subr.bf16.mxu0 0
      %732 = vmatpush1.bf16.msra.mxu0 %v458
      %733 = vmatprep.subr.bf16.mxu0 0
      %734 = vmatpush1.bf16.msra.mxu0 %v455
      %735 = vmatprep.subr.bf16.mxu0 0
      %736 = vmatpush2.bf16.msra.mxu0 0
      %737 = vmatprep.subr.bf16.mxu0 0
      %738 = vmatpush2.bf16.msra.mxu0 0
      %739 = vmatprep.subr.bf16.mxu0 0
      %740 = vmatpush2.bf16.msra.mxu0 0
      %741 = vmatprep.subr.bf16.mxu0 0
      %742 = vmatpush2.bf16.msra.mxu0 0
      %743 = vmatprep.subr.bf16.mxu0 0
      %744 = vmatpush2.bf16.msra.mxu0 0
      %745 = vmatprep.subr.bf16.mxu0 0
      %746 = vmatpush2.bf16.msra.mxu0 0
      %747 = vmatprep.subr.bf16.mxu0 0
      %748 = vmatpush2.bf16.msra.mxu0 0
      %749 = vmatprep.subr.bf16.mxu0 0
      %750 = vmatpush2.bf16.msra.mxu0 0
      %751 = vmatprep.mubr.bf16.mxu0 0
      %752 = vmatmul.mubr.bf16.gmra.mxu0 %v479
      %v753 = vpop.f32.mrf.mxu0
      %v754 = vadd.f32 0.0, %v753
      %v755 = vpop.f32.mrf.mxu0
      %v756 = vpop.f32.mrf.mxu0
      %v757 = vadd.f32 0.0, %v756
      %v758 = vpop.f32.mrf.mxu0
      %759 = vmatprep.mubr.bf16.mxu0 0
      %760 = vmatmul.mubr.bf16.gmra.mxu0 %v482
      %v761 = vpop.f32.mrf.mxu0
      %v762 = vadd.f32 0.0, %v761
      %v763 = vpop.f32.mrf.mxu0
      %v764 = vpop.f32.mrf.mxu0
      %v765 = vadd.f32 0.0, %v764
      %v766 = vpop.f32.mrf.mxu0
      %767 = vmatprep.mubr.bf16.mxu0 0
      %768 = vmatmul.mubr.bf16.gmra.mxu0 %v485
      %v769 = vpop.f32.mrf.mxu0
      %v770 = vadd.f32 0.0, %v769
      %v771 = vpop.f32.mrf.mxu0
      %v772 = vpop.f32.mrf.mxu0
      %v773 = vadd.f32 0.0, %v772
      %v774 = vpop.f32.mrf.mxu0
      %775 = vmatprep.mubr.bf16.mxu0 0
      %776 = vmatmul.mubr.bf16.gmra.mxu0 %v488
      %v777 = vpop.f32.mrf.mxu0
      %v778 = vadd.f32 0.0, %v777
      %v779 = vpop.f32.mrf.mxu0
      %v780 = vpop.f32.mrf.mxu0
      %v781 = vadd.f32 0.0, %v780
      %v782 = vpop.f32.mrf.mxu0
      %783 = vmatprep.mubr.bf16.mxu0 0
      %784 = vmatmul.mubr.bf16.gmra.mxu0 %v491
      %v785 = vpop.f32.mrf.mxu0
      %v786 = vadd.f32 0.0, %v785
      %v787 = vpop.f32.mrf.mxu0
      %v788 = vpop.f32.mrf.mxu0
      %v789 = vadd.f32 0.0, %v788
      %v790 = vpop.f32.mrf.mxu0
      %791 = vmatprep.mubr.bf16.mxu0 0
      %792 = vmatmul.mubr.bf16.gmra.mxu0 %v494
      %v793 = vpop.f32.mrf.mxu0
      %v794 = vadd.f32 0.0, %v793
      %v795 = vpop.f32.mrf.mxu0
      %v796 = vpop.f32.mrf.mxu0
      %v797 = vadd.f32 0.0, %v796
      %v798 = vpop.f32.mrf.mxu0
      %799 = vmatprep.mubr.bf16.mxu0 0
      %800 = vmatmul.mubr.bf16.gmra.mxu0 %v497
      %v801 = vpop.f32.mrf.mxu0
      %v802 = vadd.f32 0.0, %v801
      %v803 = vpop.f32.mrf.mxu0
      %v804 = vpop.f32.mrf.mxu0
      %v805 = vadd.f32 0.0, %v804
      %v806 = vpop.f32.mrf.mxu0
      %807 = vmatprep.mubr.bf16.mxu0 0
      %808 = vmatmul.mubr.bf16.gmra.mxu0 %v500
      %v809 = vpop.f32.mrf.mxu0
      %v810 = vadd.f32 0.0, %v809
      %v811 = vpop.f32.mrf.mxu0
      %v812 = vpop.f32.mrf.mxu0
      %v813 = vadd.f32 0.0, %v812
      %v814 = vpop.f32.mrf.mxu0
      %815 = vmatprep.mubr.bf16.mxu0 0
      %816 = vmatmul.mubr.bf16.gmra.mxu0 %v503
      %v817 = vpop.f32.mrf.mxu0
      %v818 = vadd.f32 0.0, %v817
      %v819 = vpop.f32.mrf.mxu0
      %v820 = vpop.f32.mrf.mxu0
      %v821 = vadd.f32 0.0, %v820
      %v822 = vpop.f32.mrf.mxu0
      %823 = vmatprep.mubr.bf16.mxu0 0
      %824 = vmatmul.mubr.bf16.gmra.mxu0 %v506
      %v825 = vpop.f32.mrf.mxu0
      %v826 = vadd.f32 0.0, %v825
      %v827 = vpop.f32.mrf.mxu0
      %v828 = vpop.f32.mrf.mxu0
      %v829 = vadd.f32 0.0, %v828
      %v830 = vpop.f32.mrf.mxu0
      %831 = vmatprep.mubr.bf16.mxu0 0
      %832 = vmatmul.mubr.bf16.gmra.mxu0 %v509
      %v833 = vpop.f32.mrf.mxu0
      %v834 = vadd.f32 0.0, %v833
      %v835 = vpop.f32.mrf.mxu0
      %v836 = vpop.f32.mrf.mxu0
      %v837 = vadd.f32 0.0, %v836
      %v838 = vpop.f32.mrf.mxu0
      %839 = vmatprep.mubr.bf16.mxu0 0
      %840 = vmatmul.mubr.bf16.gmra.mxu0 %v512
      %v841 = vpop.f32.mrf.mxu0
      %v842 = vadd.f32 0.0, %v841
      %v843 = vpop.f32.mrf.mxu0
      %v844 = vpop.f32.mrf.mxu0
      %v845 = vadd.f32 0.0, %v844
      %v846 = vpop.f32.mrf.mxu0
      %847 = vmatprep.mubr.bf16.mxu0 0
      %848 = vmatmul.mubr.bf16.gmra.mxu0 %v515
      %v849 = vpop.f32.mrf.mxu0
      %v850 = vadd.f32 0.0, %v849
      %v851 = vpop.f32.mrf.mxu0
      %v852 = vpop.f32.mrf.mxu0
      %v853 = vadd.f32 0.0, %v852
      %v854 = vpop.f32.mrf.mxu0
      %855 = vmatprep.mubr.bf16.mxu0 0
      %856 = vmatmul.mubr.bf16.gmra.mxu0 %v518
      %v857 = vpop.f32.mrf.mxu0
      %v858 = vadd.f32 0.0, %v857
      %v859 = vpop.f32.mrf.mxu0
      %v860 = vpop.f32.mrf.mxu0
      %v861 = vadd.f32 0.0, %v860
      %v862 = vpop.f32.mrf.mxu0
      %863 = vmatprep.mubr.bf16.mxu0 0
      %864 = vmatmul.mubr.bf16.gmra.mxu0 %v521
      %v865 = vpop.f32.mrf.mxu0
      %v866 = vadd.f32 0.0, %v865
      %v867 = vpop.f32.mrf.mxu0
      %v868 = vpop.f32.mrf.mxu0
      %v869 = vadd.f32 0.0, %v868
      %v870 = vpop.f32.mrf.mxu0
      %871 = vmatprep.mubr.bf16.mxu0 0
      %872 = vmatmul.mubr.bf16.gmra.mxu0 %v524
      %v873 = vpop.f32.mrf.mxu0
      %v874 = vadd.f32 0.0, %v873
      %v875 = vpop.f32.mrf.mxu0
      %v876 = vpop.f32.mrf.mxu0
      %v877 = vadd.f32 0.0, %v876
      %v878 = vpop.f32.mrf.mxu0
      %879 = vdwg.mxu0
      %v880 = vpack.c.bf16 %v565, %v561
      %v881 = vpack.c.bf16 %v575, %v571
      %v882 = vpack.c.bf16 %v585, %v581
      %v883 = vpack.c.bf16 %v595, %v591
      %v884 = vpack.c.bf16 %v605, %v601
      %v885 = vpack.c.bf16 %v615, %v611
      %v886 = vpack.c.bf16 %v625, %v621
      %v887 = vpack.c.bf16 %v635, %v631
      %v888 = vpack.c.bf16 %v645, %v641
      %v889 = vpack.c.bf16 %v655, %v651
      %v890 = vpack.c.bf16 %v665, %v661
      %v891 = vpack.c.bf16 %v675, %v671
      %v892 = vpack.c.bf16 %v685, %v681
      %v893 = vpack.c.bf16 %v695, %v691
      %v894 = vpack.c.bf16 %v705, %v701
      %v895 = vpack.c.bf16 %v715, %v711
      %v912 = vunpack.c.l.b16 %v880
      %v913 = vunpack.c.h.b16 %v880
      %v914 = vunpack.c.l.b16 %v881
      %v915 = vunpack.c.h.b16 %v881
      %v916 = vunpack.c.l.b16 %v882
      %v917 = vunpack.c.h.b16 %v882
      %v918 = vunpack.c.l.b16 %v883
      %v919 = vunpack.c.h.b16 %v883
      %v920 = vunpack.c.l.b16 %v884
      %v921 = vunpack.c.h.b16 %v884
      %v922 = vunpack.c.l.b16 %v885
      %v923 = vunpack.c.h.b16 %v885
      %v924 = vunpack.c.l.b16 %v886
      %v925 = vunpack.c.h.b16 %v886
      %v926 = vunpack.c.l.b16 %v887
      %v927 = vunpack.c.h.b16 %v887
      %v928 = vunpack.c.l.b16 %v888
      %v929 = vunpack.c.h.b16 %v888
      %v930 = vunpack.c.l.b16 %v889
      %v931 = vunpack.c.h.b16 %v889
      %v932 = vunpack.c.l.b16 %v890
      %v933 = vunpack.c.h.b16 %v890
      %v934 = vunpack.c.l.b16 %v891
      %v935 = vunpack.c.h.b16 %v891
      %v936 = vunpack.c.l.b16 %v892
      %v937 = vunpack.c.h.b16 %v892
      %v938 = vunpack.c.l.b16 %v893
      %v939 = vunpack.c.h.b16 %v893
      %v940 = vunpack.c.l.b16 %v894
      %v941 = vunpack.c.h.b16 %v894
      %v942 = vunpack.c.l.b16 %v895
      %v943 = vunpack.c.h.b16 %v895
      %v944 = vpack.c.b16 %v912, %v912
      %v945 = vpack.c.b16 %v913, %v913
      %v946 = vpack.c.b16 %v914, %v914
      %v947 = vpack.c.b16 %v915, %v915
      %v948 = vpack.c.b16 %v916, %v916
      %v949 = vpack.c.b16 %v917, %v917
      %v950 = vpack.c.b16 %v918, %v918
      %v951 = vpack.c.b16 %v919, %v919
      %v952 = vpack.c.b16 %v920, %v920
      %v953 = vpack.c.b16 %v921, %v921
      %v954 = vpack.c.b16 %v922, %v922
      %v955 = vpack.c.b16 %v923, %v923
      %v956 = vpack.c.b16 %v924, %v924
      %v957 = vpack.c.b16 %v925, %v925
      %v958 = vpack.c.b16 %v926, %v926
      %v959 = vpack.c.b16 %v927, %v927
      %v960 = vpack.c.b16 %v928, %v928
      %v961 = vpack.c.b16 %v929, %v929
      %v962 = vpack.c.b16 %v930, %v930
      %v963 = vpack.c.b16 %v931, %v931
      %v964 = vpack.c.b16 %v932, %v932
      %v965 = vpack.c.b16 %v933, %v933
      %v966 = vpack.c.b16 %v934, %v934
      %v967 = vpack.c.b16 %v935, %v935
      %v968 = vpack.c.b16 %v936, %v936
      %v969 = vpack.c.b16 %v937, %v937
      %v970 = vpack.c.b16 %v938, %v938
      %v971 = vpack.c.b16 %v939, %v939
      %v972 = vpack.c.b16 %v940, %v940
      %v973 = vpack.c.b16 %v941, %v941
      %v974 = vpack.c.b16 %v942, %v942
      %v975 = vpack.c.b16 %v943, %v943
      %vm1008 = vcmask 519168
      %1009 = vst.msk [vmem:[%s262] sm:$0xf] %vm1008, %v944
      %1010 = vst.msk [vmem:[%s262 + $0x4] sm:$0xf] %vm1008, %v945
      %1011 = vst.msk [vmem:[%s262 + $0x8] sm:$0xf] %vm1008, %v946
      %1012 = vst.msk [vmem:[%s262 + $0xc] sm:$0xf] %vm1008, %v947
      %1013 = vst.msk [vmem:[%s262 + $0x10] sm:$0xf] %vm1008, %v948
      %1014 = vst.msk [vmem:[%s262 + $0x14] sm:$0xf] %vm1008, %v949
      %1015 = vst.msk [vmem:[%s262 + $0x18] sm:$0xf] %vm1008, %v950
      %1016 = vst.msk [vmem:[%s262 + $0x1c] sm:$0xf] %vm1008, %v951
      %1017 = vst.msk [vmem:[%s262 + $0x20] sm:$0xf] %vm1008, %v952
      %1018 = vst.msk [vmem:[%s262 + $0x24] sm:$0xf] %vm1008, %v953
      %1019 = vst.msk [vmem:[%s262 + $0x28] sm:$0xf] %vm1008, %v954
      %1020 = vst.msk [vmem:[%s262 + $0x2c] sm:$0xf] %vm1008, %v955
      %1021 = vst.msk [vmem:[%s262 + $0x30] sm:$0xf] %vm1008, %v956
      %1022 = vst.msk [vmem:[%s262 + $0x34] sm:$0xf] %vm1008, %v957
      %1023 = vst.msk [vmem:[%s262 + $0x38] sm:$0xf] %vm1008, %v958
      %1024 = vst.msk [vmem:[%s262 + $0x3c] sm:$0xf] %vm1008, %v959
      %1025 = vst.msk [vmem:[%s262 + $0x40] sm:$0xf] %vm1008, %v960
      %1026 = vst.msk [vmem:[%s262 + $0x44] sm:$0xf] %vm1008, %v961
      %1027 = vst.msk [vmem:[%s262 + $0x48] sm:$0xf] %vm1008, %v962
      %1028 = vst.msk [vmem:[%s262 + $0x4c] sm:$0xf] %vm1008, %v963
      %1029 = vst.msk [vmem:[%s262 + $0x50] sm:$0xf] %vm1008, %v964
      %1030 = vst.msk [vmem:[%s262 + $0x54] sm:$0xf] %vm1008, %v965
      %1031 = vst.msk [vmem:[%s262 + $0x58] sm:$0xf] %vm1008, %v966
      %1032 = vst.msk [vmem:[%s262 + $0x5c] sm:$0xf] %vm1008, %v967
      %1033 = vst.msk [vmem:[%s262 + $0x60] sm:$0xf] %vm1008, %v968
      %1034 = vst.msk [vmem:[%s262 + $0x64] sm:$0xf] %vm1008, %v969
      %1035 = vst.msk [vmem:[%s262 + $0x68] sm:$0xf] %vm1008, %v970
      %1036 = vst.msk [vmem:[%s262 + $0x6c] sm:$0xf] %vm1008, %v971
      %1037 = vst.msk [vmem:[%s262 + $0x70] sm:$0xf] %vm1008, %v972
      %1038 = vst.msk [vmem:[%s262 + $0x74] sm:$0xf] %vm1008, %v973
      %1039 = vst.msk [vmem:[%s262 + $0x78] sm:$0xf] %vm1008, %v974
      %1040 = vst.msk [vmem:[%s262 + $0x7c] sm:$0xf] %vm1008, %v975
      %v1041 = vpack.c.bf16 %v567, %v563
      %v1042 = vpack.c.bf16 %v577, %v573
      %v1043 = vpack.c.bf16 %v587, %v583
      %v1044 = vpack.c.bf16 %v597, %v593
      %v1045 = vpack.c.bf16 %v607, %v603
      %v1046 = vpack.c.bf16 %v617, %v613
      %v1047 = vpack.c.bf16 %v627, %v623
      %v1048 = vpack.c.bf16 %v637, %v633
      %v1049 = vpack.c.bf16 %v647, %v643
      %v1050 = vpack.c.bf16 %v657, %v653
      %v1051 = vpack.c.bf16 %v667, %v663
      %v1052 = vpack.c.bf16 %v677, %v673
      %v1053 = vpack.c.bf16 %v687, %v683
      %v1054 = vpack.c.bf16 %v697, %v693
      %v1055 = vpack.c.bf16 %v707, %v703
      %v1056 = vpack.c.bf16 %v717, %v713
      %v1073 = vunpack.c.l.b16 %v1041
      %v1074 = vunpack.c.h.b16 %v1041
      %v1075 = vunpack.c.l.b16 %v1042
      %v1076 = vunpack.c.h.b16 %v1042
      %v1077 = vunpack.c.l.b16 %v1043
      %v1078 = vunpack.c.h.b16 %v1043
      %v1079 = vunpack.c.l.b16 %v1044
      %v1080 = vunpack.c.h.b16 %v1044
      %v1081 = vunpack.c.l.b16 %v1045
      %v1082 = vunpack.c.h.b16 %v1045
      %v1083 = vunpack.c.l.b16 %v1046
      %v1084 = vunpack.c.h.b16 %v1046
      %v1085 = vunpack.c.l.b16 %v1047
      %v1086 = vunpack.c.h.b16 %v1047
      %v1087 = vunpack.c.l.b16 %v1048
      %v1088 = vunpack.c.h.b16 %v1048
      %v1089 = vunpack.c.l.b16 %v1049
      %v1090 = vunpack.c.h.b16 %v1049
      %v1091 = vunpack.c.l.b16 %v1050
      %v1092 = vunpack.c.h.b16 %v1050
      %v1093 = vunpack.c.l.b16 %v1051
      %v1094 = vunpack.c.h.b16 %v1051
      %v1095 = vunpack.c.l.b16 %v1052
      %v1096 = vunpack.c.h.b16 %v1052
      %v1097 = vunpack.c.l.b16 %v1053
      %v1098 = vunpack.c.h.b16 %v1053
      %v1099 = vunpack.c.l.b16 %v1054
      %v1100 = vunpack.c.h.b16 %v1054
      %v1101 = vunpack.c.l.b16 %v1055
      %v1102 = vunpack.c.h.b16 %v1055
      %v1103 = vunpack.c.l.b16 %v1056
      %v1104 = vunpack.c.h.b16 %v1056
      %v1105 = vpack.c.b16 %v1073, %v1073
      %v1106 = vpack.c.b16 %v1074, %v1074
      %v1107 = vpack.c.b16 %v1075, %v1075
      %v1108 = vpack.c.b16 %v1076, %v1076
      %v1109 = vpack.c.b16 %v1077, %v1077
      %v1110 = vpack.c.b16 %v1078, %v1078
      %v1111 = vpack.c.b16 %v1079, %v1079
      %v1112 = vpack.c.b16 %v1080, %v1080
      %v1113 = vpack.c.b16 %v1081, %v1081
      %v1114 = vpack.c.b16 %v1082, %v1082
      %v1115 = vpack.c.b16 %v1083, %v1083
      %v1116 = vpack.c.b16 %v1084, %v1084
      %v1117 = vpack.c.b16 %v1085, %v1085
      %v1118 = vpack.c.b16 %v1086, %v1086
      %v1119 = vpack.c.b16 %v1087, %v1087
      %v1120 = vpack.c.b16 %v1088, %v1088
      %v1121 = vpack.c.b16 %v1089, %v1089
      %v1122 = vpack.c.b16 %v1090, %v1090
      %v1123 = vpack.c.b16 %v1091, %v1091
      %v1124 = vpack.c.b16 %v1092, %v1092
      %v1125 = vpack.c.b16 %v1093, %v1093
      %v1126 = vpack.c.b16 %v1094, %v1094
      %v1127 = vpack.c.b16 %v1095, %v1095
      %v1128 = vpack.c.b16 %v1096, %v1096
      %v1129 = vpack.c.b16 %v1097, %v1097
      %v1130 = vpack.c.b16 %v1098, %v1098
      %v1131 = vpack.c.b16 %v1099, %v1099
      %v1132 = vpack.c.b16 %v1100, %v1100
      %v1133 = vpack.c.b16 %v1101, %v1101
      %v1134 = vpack.c.b16 %v1102, %v1102
      %v1135 = vpack.c.b16 %v1103, %v1103
      %v1136 = vpack.c.b16 %v1104, %v1104
      %1169 = vst.msk [vmem:[%s272] sm:$0xf] %vm1008, %v1105
      %1170 = vst.msk [vmem:[%s272 + $0x4] sm:$0xf] %vm1008, %v1106
      %1171 = vst.msk [vmem:[%s272 + $0x8] sm:$0xf] %vm1008, %v1107
      %1172 = vst.msk [vmem:[%s272 + $0xc] sm:$0xf] %vm1008, %v1108
      %1173 = vst.msk [vmem:[%s272 + $0x10] sm:$0xf] %vm1008, %v1109
      %1174 = vst.msk [vmem:[%s272 + $0x14] sm:$0xf] %vm1008, %v1110
      %1175 = vst.msk [vmem:[%s272 + $0x18] sm:$0xf] %vm1008, %v1111
      %1176 = vst.msk [vmem:[%s272 + $0x1c] sm:$0xf] %vm1008, %v1112
      %1177 = vst.msk [vmem:[%s272 + $0x20] sm:$0xf] %vm1008, %v1113
      %1178 = vst.msk [vmem:[%s272 + $0x24] sm:$0xf] %vm1008, %v1114
      %1179 = vst.msk [vmem:[%s272 + $0x28] sm:$0xf] %vm1008, %v1115
      %1180 = vst.msk [vmem:[%s272 + $0x2c] sm:$0xf] %vm1008, %v1116
      %1181 = vst.msk [vmem:[%s272 + $0x30] sm:$0xf] %vm1008, %v1117
      %1182 = vst.msk [vmem:[%s272 + $0x34] sm:$0xf] %vm1008, %v1118
      %1183 = vst.msk [vmem:[%s272 + $0x38] sm:$0xf] %vm1008, %v1119
      %1184 = vst.msk [vmem:[%s272 + $0x3c] sm:$0xf] %vm1008, %v1120
      %1185 = vst.msk [vmem:[%s272 + $0x40] sm:$0xf] %vm1008, %v1121
      %1186 = vst.msk [vmem:[%s272 + $0x44] sm:$0xf] %vm1008, %v1122
      %1187 = vst.msk [vmem:[%s272 + $0x48] sm:$0xf] %vm1008, %v1123
      %1188 = vst.msk [vmem:[%s272 + $0x4c] sm:$0xf] %vm1008, %v1124
      %1189 = vst.msk [vmem:[%s272 + $0x50] sm:$0xf] %vm1008, %v1125
      %1190 = vst.msk [vmem:[%s272 + $0x54] sm:$0xf] %vm1008, %v1126
      %1191 = vst.msk [vmem:[%s272 + $0x58] sm:$0xf] %vm1008, %v1127
      %1192 = vst.msk [vmem:[%s272 + $0x5c] sm:$0xf] %vm1008, %v1128
      %1193 = vst.msk [vmem:[%s272 + $0x60] sm:$0xf] %vm1008, %v1129
      %1194 = vst.msk [vmem:[%s272 + $0x64] sm:$0xf] %vm1008, %v1130
      %1195 = vst.msk [vmem:[%s272 + $0x68] sm:$0xf] %vm1008, %v1131
      %1196 = vst.msk [vmem:[%s272 + $0x6c] sm:$0xf] %vm1008, %v1132
      %1197 = vst.msk [vmem:[%s272 + $0x70] sm:$0xf] %vm1008, %v1133
      %1198 = vst.msk [vmem:[%s272 + $0x74] sm:$0xf] %vm1008, %v1134
      %1199 = vst.msk [vmem:[%s272 + $0x78] sm:$0xf] %vm1008, %v1135
      %1200 = vst.msk [vmem:[%s272 + $0x7c] sm:$0xf] %vm1008, %v1136
      %v1201 = vpack.c.bf16 %v757, %v754
      %v1202 = vpack.c.bf16 %v765, %v762
      %v1203 = vpack.c.bf16 %v773, %v770
      %v1204 = vpack.c.bf16 %v781, %v778
      %v1205 = vpack.c.bf16 %v789, %v786
      %v1206 = vpack.c.bf16 %v797, %v794
      %v1207 = vpack.c.bf16 %v805, %v802
      %v1208 = vpack.c.bf16 %v813, %v810
      %v1209 = vpack.c.bf16 %v821, %v818
      %v1210 = vpack.c.bf16 %v829, %v826
      %v1211 = vpack.c.bf16 %v837, %v834
      %v1212 = vpack.c.bf16 %v845, %v842
      %v1213 = vpack.c.bf16 %v853, %v850
      %v1214 = vpack.c.bf16 %v861, %v858
      %v1215 = vpack.c.bf16 %v869, %v866
      %v1216 = vpack.c.bf16 %v877, %v874
      %v1233 = vunpack.c.l.b16 %v1201
      %v1234 = vunpack.c.h.b16 %v1201
      %v1235 = vunpack.c.l.b16 %v1202
      %v1236 = vunpack.c.h.b16 %v1202
      %v1237 = vunpack.c.l.b16 %v1203
      %v1238 = vunpack.c.h.b16 %v1203
      %v1239 = vunpack.c.l.b16 %v1204
      %v1240 = vunpack.c.h.b16 %v1204
      %v1241 = vunpack.c.l.b16 %v1205
      %v1242 = vunpack.c.h.b16 %v1205
      %v1243 = vunpack.c.l.b16 %v1206
      %v1244 = vunpack.c.h.b16 %v1206
      %v1245 = vunpack.c.l.b16 %v1207
      %v1246 = vunpack.c.h.b16 %v1207
      %v1247 = vunpack.c.l.b16 %v1208
      %v1248 = vunpack.c.h.b16 %v1208
      %v1249 = vunpack.c.l.b16 %v1209
      %v1250 = vunpack.c.h.b16 %v1209
      %v1251 = vunpack.c.l.b16 %v1210
      %v1252 = vunpack.c.h.b16 %v1210
      %v1253 = vunpack.c.l.b16 %v1211
      %v1254 = vunpack.c.h.b16 %v1211
      %v1255 = vunpack.c.l.b16 %v1212
      %v1256 = vunpack.c.h.b16 %v1212
      %v1257 = vunpack.c.l.b16 %v1213
      %v1258 = vunpack.c.h.b16 %v1213
      %v1259 = vunpack.c.l.b16 %v1214
      %v1260 = vunpack.c.h.b16 %v1214
      %v1261 = vunpack.c.l.b16 %v1215
      %v1262 = vunpack.c.h.b16 %v1215
      %v1263 = vunpack.c.l.b16 %v1216
      %v1264 = vunpack.c.h.b16 %v1216
      %v1265 = vpack.c.b16 %v1233, %v1233
      %v1266 = vpack.c.b16 %v1234, %v1234
      %v1267 = vpack.c.b16 %v1235, %v1235
      %v1268 = vpack.c.b16 %v1236, %v1236
      %v1269 = vpack.c.b16 %v1237, %v1237
      %v1270 = vpack.c.b16 %v1238, %v1238
      %v1271 = vpack.c.b16 %v1239, %v1239
      %v1272 = vpack.c.b16 %v1240, %v1240
      %v1273 = vpack.c.b16 %v1241, %v1241
      %v1274 = vpack.c.b16 %v1242, %v1242
      %v1275 = vpack.c.b16 %v1243, %v1243
      %v1276 = vpack.c.b16 %v1244, %v1244
      %v1277 = vpack.c.b16 %v1245, %v1245
      %v1278 = vpack.c.b16 %v1246, %v1246
      %v1279 = vpack.c.b16 %v1247, %v1247
      %v1280 = vpack.c.b16 %v1248, %v1248
      %v1281 = vpack.c.b16 %v1249, %v1249
      %v1282 = vpack.c.b16 %v1250, %v1250
      %v1283 = vpack.c.b16 %v1251, %v1251
      %v1284 = vpack.c.b16 %v1252, %v1252
      %v1285 = vpack.c.b16 %v1253, %v1253
      %v1286 = vpack.c.b16 %v1254, %v1254
      %v1287 = vpack.c.b16 %v1255, %v1255
      %v1288 = vpack.c.b16 %v1256, %v1256
      %v1289 = vpack.c.b16 %v1257, %v1257
      %v1290 = vpack.c.b16 %v1258, %v1258
      %v1291 = vpack.c.b16 %v1259, %v1259
      %v1292 = vpack.c.b16 %v1260, %v1260
      %v1293 = vpack.c.b16 %v1261, %v1261
      %v1294 = vpack.c.b16 %v1262, %v1262
      %v1295 = vpack.c.b16 %v1263, %v1263
      %v1296 = vpack.c.b16 %v1264, %v1264
      %1329 = vst.msk [vmem:[%s282] sm:$0xf] %vm1008, %v1265
      %1330 = vst.msk [vmem:[%s282 + $0x4] sm:$0xf] %vm1008, %v1266
      %1331 = vst.msk [vmem:[%s282 + $0x8] sm:$0xf] %vm1008, %v1267
      %1332 = vst.msk [vmem:[%s282 + $0xc] sm:$0xf] %vm1008, %v1268
      %1333 = vst.msk [vmem:[%s282 + $0x10] sm:$0xf] %vm1008, %v1269
      %1334 = vst.msk [vmem:[%s282 + $0x14] sm:$0xf] %vm1008, %v1270
      %1335 = vst.msk [vmem:[%s282 + $0x18] sm:$0xf] %vm1008, %v1271
      %1336 = vst.msk [vmem:[%s282 + $0x1c] sm:$0xf] %vm1008, %v1272
      %1337 = vst.msk [vmem:[%s282 + $0x20] sm:$0xf] %vm1008, %v1273
      %1338 = vst.msk [vmem:[%s282 + $0x24] sm:$0xf] %vm1008, %v1274
      %1339 = vst.msk [vmem:[%s282 + $0x28] sm:$0xf] %vm1008, %v1275
      %1340 = vst.msk [vmem:[%s282 + $0x2c] sm:$0xf] %vm1008, %v1276
      %1341 = vst.msk [vmem:[%s282 + $0x30] sm:$0xf] %vm1008, %v1277
      %1342 = vst.msk [vmem:[%s282 + $0x34] sm:$0xf] %vm1008, %v1278
      %1343 = vst.msk [vmem:[%s282 + $0x38] sm:$0xf] %vm1008, %v1279
      %1344 = vst.msk [vmem:[%s282 + $0x3c] sm:$0xf] %vm1008, %v1280
      %1345 = vst.msk [vmem:[%s282 + $0x40] sm:$0xf] %vm1008, %v1281
      %1346 = vst.msk [vmem:[%s282 + $0x44] sm:$0xf] %vm1008, %v1282
      %1347 = vst.msk [vmem:[%s282 + $0x48] sm:$0xf] %vm1008, %v1283
      %1348 = vst.msk [vmem:[%s282 + $0x4c] sm:$0xf] %vm1008, %v1284
      %1349 = vst.msk [vmem:[%s282 + $0x50] sm:$0xf] %vm1008, %v1285
      %1350 = vst.msk [vmem:[%s282 + $0x54] sm:$0xf] %vm1008, %v1286
      %1351 = vst.msk [vmem:[%s282 + $0x58] sm:$0xf] %vm1008, %v1287
      %1352 = vst.msk [vmem:[%s282 + $0x5c] sm:$0xf] %vm1008, %v1288
      %1353 = vst.msk [vmem:[%s282 + $0x60] sm:$0xf] %vm1008, %v1289
      %1354 = vst.msk [vmem:[%s282 + $0x64] sm:$0xf] %vm1008, %v1290
      %1355 = vst.msk [vmem:[%s282 + $0x68] sm:$0xf] %vm1008, %v1291
      %1356 = vst.msk [vmem:[%s282 + $0x6c] sm:$0xf] %vm1008, %v1292
      %1357 = vst.msk [vmem:[%s282 + $0x70] sm:$0xf] %vm1008, %v1293
      %1358 = vst.msk [vmem:[%s282 + $0x74] sm:$0xf] %vm1008, %v1294
      %1359 = vst.msk [vmem:[%s282 + $0x78] sm:$0xf] %vm1008, %v1295
      %1360 = vst.msk [vmem:[%s282 + $0x7c] sm:$0xf] %vm1008, %v1296
      %1361 = vrot.lane.b32.xlu0 %v944, 64
      %v1362 = vpop.permute.xlu0 %1361
      %1363 = vrot.lane.b32.xlu0 %v945, 64
      %v1364 = vpop.permute.xlu0 %1363
      %1365 = vrot.lane.b32.xlu0 %v946, 64
      %v1366 = vpop.permute.xlu0 %1365
      %1367 = vrot.lane.b32.xlu0 %v947, 64
      %v1368 = vpop.permute.xlu0 %1367
      %1369 = vrot.lane.b32.xlu0 %v948, 64
      %v1370 = vpop.permute.xlu0 %1369
      %1371 = vrot.lane.b32.xlu0 %v949, 64
      %v1372 = vpop.permute.xlu0 %1371
      %1373 = vrot.lane.b32.xlu0 %v950, 64
      %v1374 = vpop.permute.xlu0 %1373
      %1375 = vrot.lane.b32.xlu0 %v951, 64
      %v1376 = vpop.permute.xlu0 %1375
      %1377 = vrot.lane.b32.xlu0 %v952, 64
      %v1378 = vpop.permute.xlu0 %1377
      %1379 = vrot.lane.b32.xlu0 %v953, 64
      %v1380 = vpop.permute.xlu0 %1379
      %1381 = vrot.lane.b32.xlu0 %v954, 64
      %v1382 = vpop.permute.xlu0 %1381
      %1383 = vrot.lane.b32.xlu0 %v955, 64
      %v1384 = vpop.permute.xlu0 %1383
      %1385 = vrot.lane.b32.xlu0 %v956, 64
      %v1386 = vpop.permute.xlu0 %1385
      %1387 = vrot.lane.b32.xlu0 %v957, 64
      %v1388 = vpop.permute.xlu0 %1387
      %1389 = vrot.lane.b32.xlu0 %v958, 64
      %v1390 = vpop.permute.xlu0 %1389
      %1391 = vrot.lane.b32.xlu0 %v959, 64
      %v1392 = vpop.permute.xlu0 %1391
      %1393 = vrot.lane.b32.xlu0 %v960, 64
      %v1394 = vpop.permute.xlu0 %1393
      %1395 = vrot.lane.b32.xlu0 %v961, 64
      %v1396 = vpop.permute.xlu0 %1395
      %1397 = vrot.lane.b32.xlu0 %v962, 64
      %v1398 = vpop.permute.xlu0 %1397
      %1399 = vrot.lane.b32.xlu0 %v963, 64
      %v1400 = vpop.permute.xlu0 %1399
      %1401 = vrot.lane.b32.xlu0 %v964, 64
      %v1402 = vpop.permute.xlu0 %1401
      %1403 = vrot.lane.b32.xlu0 %v965, 64
      %v1404 = vpop.permute.xlu0 %1403
      %1405 = vrot.lane.b32.xlu0 %v966, 64
      %v1406 = vpop.permute.xlu0 %1405
      %1407 = vrot.lane.b32.xlu0 %v967, 64
      %v1408 = vpop.permute.xlu0 %1407
      %1409 = vrot.lane.b32.xlu0 %v968, 64
      %v1410 = vpop.permute.xlu0 %1409
      %1411 = vrot.lane.b32.xlu0 %v969, 64
      %v1412 = vpop.permute.xlu0 %1411
      %1413 = vrot.lane.b32.xlu0 %v970, 64
      %v1414 = vpop.permute.xlu0 %1413
      %1415 = vrot.lane.b32.xlu0 %v971, 64
      %v1416 = vpop.permute.xlu0 %1415
      %1417 = vrot.lane.b32.xlu0 %v972, 64
      %v1418 = vpop.permute.xlu0 %1417
      %1419 = vrot.lane.b32.xlu0 %v973, 64
      %v1420 = vpop.permute.xlu0 %1419
      %1421 = vrot.lane.b32.xlu0 %v974, 64
      %v1422 = vpop.permute.xlu0 %1421
      %1423 = vrot.lane.b32.xlu0 %v975, 64
      %v1424 = vpop.permute.xlu0 %1423
      %s1457 = scalar_lea.vmem %s262, 128
      %1458 = vst.msk [vmem:[%s1457] sm:$0xf] %vm1008, %v1362
      %1459 = vst.msk [vmem:[%s1457 + $0x4] sm:$0xf] %vm1008, %v1364
      %1460 = vst.msk [vmem:[%s1457 + $0x8] sm:$0xf] %vm1008, %v1366
      %1461 = vst.msk [vmem:[%s1457 + $0xc] sm:$0xf] %vm1008, %v1368
      %1462 = vst.msk [vmem:[%s1457 + $0x10] sm:$0xf] %vm1008, %v1370
      %1463 = vst.msk [vmem:[%s1457 + $0x14] sm:$0xf] %vm1008, %v1372
      %1464 = vst.msk [vmem:[%s1457 + $0x18] sm:$0xf] %vm1008, %v1374
      %1465 = vst.msk [vmem:[%s1457 + $0x1c] sm:$0xf] %vm1008, %v1376
      %1466 = vst.msk [vmem:[%s1457 + $0x20] sm:$0xf] %vm1008, %v1378
      %1467 = vst.msk [vmem:[%s1457 + $0x24] sm:$0xf] %vm1008, %v1380
      %1468 = vst.msk [vmem:[%s1457 + $0x28] sm:$0xf] %vm1008, %v1382
      %1469 = vst.msk [vmem:[%s1457 + $0x2c] sm:$0xf] %vm1008, %v1384
      %1470 = vst.msk [vmem:[%s1457 + $0x30] sm:$0xf] %vm1008, %v1386
      %1471 = vst.msk [vmem:[%s1457 + $0x34] sm:$0xf] %vm1008, %v1388
      %1472 = vst.msk [vmem:[%s1457 + $0x38] sm:$0xf] %vm1008, %v1390
      %1473 = vst.msk [vmem:[%s1457 + $0x3c] sm:$0xf] %vm1008, %v1392
      %1474 = vst.msk [vmem:[%s1457 + $0x40] sm:$0xf] %vm1008, %v1394
      %1475 = vst.msk [vmem:[%s1457 + $0x44] sm:$0xf] %vm1008, %v1396
      %1476 = vst.msk [vmem:[%s1457 + $0x48] sm:$0xf] %vm1008, %v1398
      %1477 = vst.msk [vmem:[%s1457 + $0x4c] sm:$0xf] %vm1008, %v1400
      %1478 = vst.msk [vmem:[%s1457 + $0x50] sm:$0xf] %vm1008, %v1402
      %1479 = vst.msk [vmem:[%s1457 + $0x54] sm:$0xf] %vm1008, %v1404
      %1480 = vst.msk [vmem:[%s1457 + $0x58] sm:$0xf] %vm1008, %v1406
      %1481 = vst.msk [vmem:[%s1457 + $0x5c] sm:$0xf] %vm1008, %v1408
      %1482 = vst.msk [vmem:[%s1457 + $0x60] sm:$0xf] %vm1008, %v1410
      %1483 = vst.msk [vmem:[%s1457 + $0x64] sm:$0xf] %vm1008, %v1412
      %1484 = vst.msk [vmem:[%s1457 + $0x68] sm:$0xf] %vm1008, %v1414
      %1485 = vst.msk [vmem:[%s1457 + $0x6c] sm:$0xf] %vm1008, %v1416
      %1486 = vst.msk [vmem:[%s1457 + $0x70] sm:$0xf] %vm1008, %v1418
      %1487 = vst.msk [vmem:[%s1457 + $0x74] sm:$0xf] %vm1008, %v1420
      %1488 = vst.msk [vmem:[%s1457 + $0x78] sm:$0xf] %vm1008, %v1422
      %1489 = vst.msk [vmem:[%s1457 + $0x7c] sm:$0xf] %vm1008, %v1424
      %1490 = vrot.lane.b32.xlu0 %v1105, 64
      %v1491 = vpop.permute.xlu0 %1490
      %1492 = vrot.lane.b32.xlu0 %v1106, 64
      %v1493 = vpop.permute.xlu0 %1492
      %1494 = vrot.lane.b32.xlu0 %v1107, 64
      %v1495 = vpop.permute.xlu0 %1494
      %1496 = vrot.lane.b32.xlu0 %v1108, 64
      %v1497 = vpop.permute.xlu0 %1496
      %1498 = vrot.lane.b32.xlu0 %v1109, 64
      %v1499 = vpop.permute.xlu0 %1498
      %1500 = vrot.lane.b32.xlu0 %v1110, 64
      %v1501 = vpop.permute.xlu0 %1500
      %1502 = vrot.lane.b32.xlu0 %v1111, 64
      %v1503 = vpop.permute.xlu0 %1502
      %1504 = vrot.lane.b32.xlu0 %v1112, 64
      %v1505 = vpop.permute.xlu0 %1504
      %1506 = vrot.lane.b32.xlu0 %v1113, 64
      %v1507 = vpop.permute.xlu0 %1506
      %1508 = vrot.lane.b32.xlu0 %v1114, 64
      %v1509 = vpop.permute.xlu0 %1508
      %1510 = vrot.lane.b32.xlu0 %v1115, 64
      %v1511 = vpop.permute.xlu0 %1510
      %1512 = vrot.lane.b32.xlu0 %v1116, 64
      %v1513 = vpop.permute.xlu0 %1512
      %1514 = vrot.lane.b32.xlu0 %v1117, 64
      %v1515 = vpop.permute.xlu0 %1514
      %1516 = vrot.lane.b32.xlu0 %v1118, 64
      %v1517 = vpop.permute.xlu0 %1516
      %1518 = vrot.lane.b32.xlu0 %v1119, 64
      %v1519 = vpop.permute.xlu0 %1518
      %1520 = vrot.lane.b32.xlu0 %v1120, 64
      %v1521 = vpop.permute.xlu0 %1520
      %1522 = vrot.lane.b32.xlu0 %v1121, 64
      %v1523 = vpop.permute.xlu0 %1522
      %1524 = vrot.lane.b32.xlu0 %v1122, 64
      %v1525 = vpop.permute.xlu0 %1524
      %1526 = vrot.lane.b32.xlu0 %v1123, 64
      %v1527 = vpop.permute.xlu0 %1526
      %1528 = vrot.lane.b32.xlu0 %v1124, 64
      %v1529 = vpop.permute.xlu0 %1528
      %1530 = vrot.lane.b32.xlu0 %v1125, 64
      %v1531 = vpop.permute.xlu0 %1530
      %1532 = vrot.lane.b32.xlu0 %v1126, 64
      %v1533 = vpop.permute.xlu0 %1532
      %1534 = vrot.lane.b32.xlu0 %v1127, 64
      %v1535 = vpop.permute.xlu0 %1534
      %1536 = vrot.lane.b32.xlu0 %v1128, 64
      %v1537 = vpop.permute.xlu0 %1536
      %1538 = vrot.lane.b32.xlu0 %v1129, 64
      %v1539 = vpop.permute.xlu0 %1538
      %1540 = vrot.lane.b32.xlu0 %v1130, 64
      %v1541 = vpop.permute.xlu0 %1540
      %1542 = vrot.lane.b32.xlu0 %v1131, 64
      %v1543 = vpop.permute.xlu0 %1542
      %1544 = vrot.lane.b32.xlu0 %v1132, 64
      %v1545 = vpop.permute.xlu0 %1544
      %1546 = vrot.lane.b32.xlu0 %v1133, 64
      %v1547 = vpop.permute.xlu0 %1546
      %1548 = vrot.lane.b32.xlu0 %v1134, 64
      %v1549 = vpop.permute.xlu0 %1548
      %1550 = vrot.lane.b32.xlu0 %v1135, 64
      %v1551 = vpop.permute.xlu0 %1550
      %1552 = vrot.lane.b32.xlu0 %v1136, 64
      %v1553 = vpop.permute.xlu0 %1552
      %s1586 = scalar_lea.vmem %s272, 128
      %1587 = vst.msk [vmem:[%s1586] sm:$0xf] %vm1008, %v1491
      %1588 = vst.msk [vmem:[%s1586 + $0x4] sm:$0xf] %vm1008, %v1493
      %1589 = vst.msk [vmem:[%s1586 + $0x8] sm:$0xf] %vm1008, %v1495
      %1590 = vst.msk [vmem:[%s1586 + $0xc] sm:$0xf] %vm1008, %v1497
      %1591 = vst.msk [vmem:[%s1586 + $0x10] sm:$0xf] %vm1008, %v1499
      %1592 = vst.msk [vmem:[%s1586 + $0x14] sm:$0xf] %vm1008, %v1501
      %1593 = vst.msk [vmem:[%s1586 + $0x18] sm:$0xf] %vm1008, %v1503
      %1594 = vst.msk [vmem:[%s1586 + $0x1c] sm:$0xf] %vm1008, %v1505
      %1595 = vst.msk [vmem:[%s1586 + $0x20] sm:$0xf] %vm1008, %v1507
      %1596 = vst.msk [vmem:[%s1586 + $0x24] sm:$0xf] %vm1008, %v1509
      %1597 = vst.msk [vmem:[%s1586 + $0x28] sm:$0xf] %vm1008, %v1511
      %1598 = vst.msk [vmem:[%s1586 + $0x2c] sm:$0xf] %vm1008, %v1513
      %1599 = vst.msk [vmem:[%s1586 + $0x30] sm:$0xf] %vm1008, %v1515
      %1600 = vst.msk [vmem:[%s1586 + $0x34] sm:$0xf] %vm1008, %v1517
      %1601 = vst.msk [vmem:[%s1586 + $0x38] sm:$0xf] %vm1008, %v1519
      %1602 = vst.msk [vmem:[%s1586 + $0x3c] sm:$0xf] %vm1008, %v1521
      %1603 = vst.msk [vmem:[%s1586 + $0x40] sm:$0xf] %vm1008, %v1523
      %1604 = vst.msk [vmem:[%s1586 + $0x44] sm:$0xf] %vm1008, %v1525
      %1605 = vst.msk [vmem:[%s1586 + $0x48] sm:$0xf] %vm1008, %v1527
      %1606 = vst.msk [vmem:[%s1586 + $0x4c] sm:$0xf] %vm1008, %v1529
      %1607 = vst.msk [vmem:[%s1586 + $0x50] sm:$0xf] %vm1008, %v1531
      %1608 = vst.msk [vmem:[%s1586 + $0x54] sm:$0xf] %vm1008, %v1533
      %1609 = vst.msk [vmem:[%s1586 + $0x58] sm:$0xf] %vm1008, %v1535
      %1610 = vst.msk [vmem:[%s1586 + $0x5c] sm:$0xf] %vm1008, %v1537
      %1611 = vst.msk [vmem:[%s1586 + $0x60] sm:$0xf] %vm1008, %v1539
      %1612 = vst.msk [vmem:[%s1586 + $0x64] sm:$0xf] %vm1008, %v1541
      %1613 = vst.msk [vmem:[%s1586 + $0x68] sm:$0xf] %vm1008, %v1543
      %1614 = vst.msk [vmem:[%s1586 + $0x6c] sm:$0xf] %vm1008, %v1545
      %1615 = vst.msk [vmem:[%s1586 + $0x70] sm:$0xf] %vm1008, %v1547
      %1616 = vst.msk [vmem:[%s1586 + $0x74] sm:$0xf] %vm1008, %v1549
      %1617 = vst.msk [vmem:[%s1586 + $0x78] sm:$0xf] %vm1008, %v1551
      %1618 = vst.msk [vmem:[%s1586 + $0x7c] sm:$0xf] %vm1008, %v1553
      %1619 = vrot.lane.b32.xlu0 %v1265, 64
      %v1620 = vpop.permute.xlu0 %1619
      %1621 = vrot.lane.b32.xlu0 %v1266, 64
      %v1622 = vpop.permute.xlu0 %1621
      %1623 = vrot.lane.b32.xlu0 %v1267, 64
      %v1624 = vpop.permute.xlu0 %1623
      %1625 = vrot.lane.b32.xlu0 %v1268, 64
      %v1626 = vpop.permute.xlu0 %1625
      %1627 = vrot.lane.b32.xlu0 %v1269, 64
      %v1628 = vpop.permute.xlu0 %1627
      %1629 = vrot.lane.b32.xlu0 %v1270, 64
      %v1630 = vpop.permute.xlu0 %1629
      %1631 = vrot.lane.b32.xlu0 %v1271, 64
      %v1632 = vpop.permute.xlu0 %1631
      %1633 = vrot.lane.b32.xlu0 %v1272, 64
      %v1634 = vpop.permute.xlu0 %1633
      %1635 = vrot.lane.b32.xlu0 %v1273, 64
      %v1636 = vpop.permute.xlu0 %1635
      %1637 = vrot.lane.b32.xlu0 %v1274, 64
      %v1638 = vpop.permute.xlu0 %1637
      %1639 = vrot.lane.b32.xlu0 %v1275, 64
      %v1640 = vpop.permute.xlu0 %1639
      %1641 = vrot.lane.b32.xlu0 %v1276, 64
      %v1642 = vpop.permute.xlu0 %1641
      %1643 = vrot.lane.b32.xlu0 %v1277, 64
      %v1644 = vpop.permute.xlu0 %1643
      %1645 = vrot.lane.b32.xlu0 %v1278, 64
      %v1646 = vpop.permute.xlu0 %1645
      %1647 = vrot.lane.b32.xlu0 %v1279, 64
      %v1648 = vpop.permute.xlu0 %1647
      %1649 = vrot.lane.b32.xlu0 %v1280, 64
      %v1650 = vpop.permute.xlu0 %1649
      %1651 = vrot.lane.b32.xlu0 %v1281, 64
      %v1652 = vpop.permute.xlu0 %1651
      %1653 = vrot.lane.b32.xlu0 %v1282, 64
      %v1654 = vpop.permute.xlu0 %1653
      %1655 = vrot.lane.b32.xlu0 %v1283, 64
      %v1656 = vpop.permute.xlu0 %1655
      %1657 = vrot.lane.b32.xlu0 %v1284, 64
      %v1658 = vpop.permute.xlu0 %1657
      %1659 = vrot.lane.b32.xlu0 %v1285, 64
      %v1660 = vpop.permute.xlu0 %1659
      %1661 = vrot.lane.b32.xlu0 %v1286, 64
      %v1662 = vpop.permute.xlu0 %1661
      %1663 = vrot.lane.b32.xlu0 %v1287, 64
      %v1664 = vpop.permute.xlu0 %1663
      %1665 = vrot.lane.b32.xlu0 %v1288, 64
      %v1666 = vpop.permute.xlu0 %1665
      %1667 = vrot.lane.b32.xlu0 %v1289, 64
      %v1668 = vpop.permute.xlu0 %1667
      %1669 = vrot.lane.b32.xlu0 %v1290, 64
      %v1670 = vpop.permute.xlu0 %1669
      %1671 = vrot.lane.b32.xlu0 %v1291, 64
      %v1672 = vpop.permute.xlu0 %1671
      %1673 = vrot.lane.b32.xlu0 %v1292, 64
      %v1674 = vpop.permute.xlu0 %1673
      %1675 = vrot.lane.b32.xlu0 %v1293, 64
      %v1676 = vpop.permute.xlu0 %1675
      %1677 = vrot.lane.b32.xlu0 %v1294, 64
      %v1678 = vpop.permute.xlu0 %1677
      %1679 = vrot.lane.b32.xlu0 %v1295, 64
      %v1680 = vpop.permute.xlu0 %1679
      %1681 = vrot.lane.b32.xlu0 %v1296, 64
      %v1682 = vpop.permute.xlu0 %1681
      %s1715 = scalar_lea.vmem %s282, 128
      %1716 = vst.msk [vmem:[%s1715] sm:$0xf] %vm1008, %v1620
      %1717 = vst.msk [vmem:[%s1715 + $0x4] sm:$0xf] %vm1008, %v1622
      %1718 = vst.msk [vmem:[%s1715 + $0x8] sm:$0xf] %vm1008, %v1624
      %1719 = vst.msk [vmem:[%s1715 + $0xc] sm:$0xf] %vm1008, %v1626
      %1720 = vst.msk [vmem:[%s1715 + $0x10] sm:$0xf] %vm1008, %v1628
      %1721 = vst.msk [vmem:[%s1715 + $0x14] sm:$0xf] %vm1008, %v1630
      %1722 = vst.msk [vmem:[%s1715 + $0x18] sm:$0xf] %vm1008, %v1632
      %1723 = vst.msk [vmem:[%s1715 + $0x1c] sm:$0xf] %vm1008, %v1634
      %1724 = vst.msk [vmem:[%s1715 + $0x20] sm:$0xf] %vm1008, %v1636
      %1725 = vst.msk [vmem:[%s1715 + $0x24] sm:$0xf] %vm1008, %v1638
      %1726 = vst.msk [vmem:[%s1715 + $0x28] sm:$0xf] %vm1008, %v1640
      %1727 = vst.msk [vmem:[%s1715 + $0x2c] sm:$0xf] %vm1008, %v1642
      %1728 = vst.msk [vmem:[%s1715 + $0x30] sm:$0xf] %vm1008, %v1644
      %1729 = vst.msk [vmem:[%s1715 + $0x34] sm:$0xf] %vm1008, %v1646
      %1730 = vst.msk [vmem:[%s1715 + $0x38] sm:$0xf] %vm1008, %v1648
      %1731 = vst.msk [vmem:[%s1715 + $0x3c] sm:$0xf] %vm1008, %v1650
      %1732 = vst.msk [vmem:[%s1715 + $0x40] sm:$0xf] %vm1008, %v1652
      %1733 = vst.msk [vmem:[%s1715 + $0x44] sm:$0xf] %vm1008, %v1654
      %1734 = vst.msk [vmem:[%s1715 + $0x48] sm:$0xf] %vm1008, %v1656
      %1735 = vst.msk [vmem:[%s1715 + $0x4c] sm:$0xf] %vm1008, %v1658
      %1736 = vst.msk [vmem:[%s1715 + $0x50] sm:$0xf] %vm1008, %v1660
      %1737 = vst.msk [vmem:[%s1715 + $0x54] sm:$0xf] %vm1008, %v1662
      %1738 = vst.msk [vmem:[%s1715 + $0x58] sm:$0xf] %vm1008, %v1664
      %1739 = vst.msk [vmem:[%s1715 + $0x5c] sm:$0xf] %vm1008, %v1666
      %1740 = vst.msk [vmem:[%s1715 + $0x60] sm:$0xf] %vm1008, %v1668
      %1741 = vst.msk [vmem:[%s1715 + $0x64] sm:$0xf] %vm1008, %v1670
      %1742 = vst.msk [vmem:[%s1715 + $0x68] sm:$0xf] %vm1008, %v1672
      %1743 = vst.msk [vmem:[%s1715 + $0x6c] sm:$0xf] %vm1008, %v1674
      %1744 = vst.msk [vmem:[%s1715 + $0x70] sm:$0xf] %vm1008, %v1676
      %1745 = vst.msk [vmem:[%s1715 + $0x74] sm:$0xf] %vm1008, %v1678
      %1746 = vst.msk [vmem:[%s1715 + $0x78] sm:$0xf] %vm1008, %v1680
      %1747 = vst.msk [vmem:[%s1715 + $0x7c] sm:$0xf] %vm1008, %v1682
      %s1748 = smul.u32 32, %s21
      %p1749 = scmp.lt.s32.totalorder %s20, 1
      %s1750 = scalar_select %p1749, %s20, 1
      %p1751 = scmp.lt.s32.totalorder %s1748, 31
      %s1752 = scalar_select %p1751, %s1748, 31
      %s1753 = smul.addr %s1750, 64
      %s1754 = sadd.s32 %s1752, %s1753
      %s1755 = smul.addr %s1754, 4
      %s1756 = scalar_lea.vmem %s2, %s1755
      %s1757 = smul.u32 32, %s21
      %p1758 = scmp.lt.s32.totalorder %s20, 1
      %s1759 = scalar_select %p1758, %s20, 1
      %p1760 = scmp.lt.s32.totalorder %s1757, 31
      %s1761 = scalar_select %p1760, %s1757, 31
      %s1762 = smul.addr %s1759, 64
      %s1763 = sadd.s32 %s1761, %s1762
      %s1764 = smul.addr %s1763, 4
      %s1765 = scalar_lea.vmem %s3, %s1764
      %s1766 = smul.u32 32, %s21
      %p1767 = scmp.lt.s32.totalorder %s20, 1
      %s1768 = scalar_select %p1767, %s20, 1
      %p1769 = scmp.lt.s32.totalorder %s1766, 31
      %s1770 = scalar_select %p1769, %s1766, 31
      %s1771 = smul.addr %s1768, 64
      %s1772 = sadd.s32 %s1770, %s1771
      %s1773 = smul.addr %s1772, 4
      %s1774 = scalar_lea.vmem %s4, %s1773
      // Predicated region
      $region29: #{tpu_custom_call.1} parent=27 // pred_check
        %p1775 = pneg %p97
      $region30: #{tpu_custom_call.1} parent=27 // pred_check_branch
        %1777 = sbr.rel (%p1775) target = $region32
      $region31: #{tpu_custom_call.1} parent=27 // pred_region
        %s1778 = smul.u32 32, %s21
      $region32: #{tpu_custom_call.1} parent=27 // pred_fallthru
        _
      // Predicated region
      $region33: #{tpu_custom_call.1} parent=27 // pred_check
        %p1779 = pneg %p125
      $region34: #{tpu_custom_call.1} parent=27 // pred_check_branch
        %1781 = sbr.rel (%p1779) target = $region36
      $region35: #{tpu_custom_call.1} parent=27 // pred_region
        %s1782 = smul.u32 32, %s21
      $region36: #{tpu_custom_call.1} parent=27 // pred_fallthru
        _
      // Predicated region
      $region37: #{tpu_custom_call.1} parent=27 // pred_check
        %p1783 = pneg %p153
      $region38: #{tpu_custom_call.1} parent=27 // pred_check_branch
        %1785 = sbr.rel (%p1783) target = $region40
      $region39: #{tpu_custom_call.1} parent=27 // pred_region
        %s1786 = smul.u32 32, %s21
      $region40: #{tpu_custom_call.1} parent=27 // pred_fallthru
        _
    $region28: #{tpu_custom_call.1} parent=5 // pred_fallthru
      _
    %p1787 = scmp.le.s32.totalorder 2, %s11
    // Predicated region
    $region41: #{tpu_custom_call.1} parent=5 // pred_check
      %p1788 = pneg %p1787
    $region42: #{tpu_custom_call.1} parent=5 // pred_check_branch
      %1790 = sbr.rel (%p1788) target = $region44
    $region43: #{tpu_custom_call.1} parent=5 // pred_region
      %s1791 = ssub.s32 %s11, 2
      // Predicated region
      $region45: #{tpu_custom_call.1} parent=43 // pred_check
        %p1792 = pneg %p103
      $region46: #{tpu_custom_call.1} parent=43 // pred_check_branch
        %1794 = sbr.rel (%p1792) target = $region48
      $region47: #{tpu_custom_call.1} parent=43 // pred_region
        %s1795 = smul.u32 32, %s23
        %p1796 = scmp.lt.s32.totalorder %s22, 1
        %s1797 = scalar_select %p1796, %s22, 1
        %p1798 = scmp.lt.s32.totalorder %s1795, 31
        %s1799 = scalar_select %p1798, %s1795, 31
        %s1800 = smul.addr %s1797, 64
        %s1801 = sadd.s32 %s1799, %s1800
        %s1802 = smul.addr %s1801, 4
        %s1803 = scalar_lea.vmem %s2, %s1802
      $region48: #{tpu_custom_call.1} parent=43 // pred_fallthru
        _
      // Predicated region
      $region49: #{tpu_custom_call.1} parent=43 // pred_check
        %p1804 = pneg %p131
      $region50: #{tpu_custom_call.1} parent=43 // pred_check_branch
        %1806 = sbr.rel (%p1804) target = $region52
      $region51: #{tpu_custom_call.1} parent=43 // pred_region
        %s1807 = smul.u32 32, %s23
        %p1808 = scmp.lt.s32.totalorder %s22, 1
        %s1809 = scalar_select %p1808, %s22, 1
        %p1810 = scmp.lt.s32.totalorder %s1807, 31
        %s1811 = scalar_select %p1810, %s1807, 31
        %s1812 = smul.addr %s1809, 64
        %s1813 = sadd.s32 %s1811, %s1812
        %s1814 = smul.addr %s1813, 4
        %s1815 = scalar_lea.vmem %s3, %s1814
      $region52: #{tpu_custom_call.1} parent=43 // pred_fallthru
        _
      // Predicated region
      $region53: #{tpu_custom_call.1} parent=43 // pred_check
        %p1816 = pneg %p159
      $region54: #{tpu_custom_call.1} parent=43 // pred_check_branch
        %1818 = sbr.rel (%p1816) target = $region56
      $region55: #{tpu_custom_call.1} parent=43 // pred_region
        %s1819 = smul.u32 32, %s23
        %p1820 = scmp.lt.s32.totalorder %s22, 1
        %s1821 = scalar_select %p1820, %s22, 1
        %p1822 = scmp.lt.s32.totalorder %s1819, 31
        %s1823 = scalar_select %p1822, %s1819, 31
        %s1824 = smul.addr %s1821, 64
        %s1825 = sadd.s32 %s1823, %s1824
        %s1826 = smul.addr %s1825, 4
        %s1827 = scalar_lea.vmem %s4, %s1826
      $region56: #{tpu_custom_call.1} parent=43 // pred_fallthru
        _
    $region44: #{tpu_custom_call.1} parent=5 // pred_fallthru
      _
  $region6: #{tpu_custom_call.1} parent=0 // loop_footer
    %s15 = sadd.s32 1, %s11
  $region7: #{tpu_custom_call.1} parent=0 // loop_footer_branch
    %10 = sbr.rel target = $region3
  $region8: #{tpu_custom_call.1} parent=0 // loop_exit
    _

</llo_original>
